<compile_context>
chip_gen: v5e
topology: v5e:2x2
jax: 0.10.0
libtpu: 0.0.40
codegen_flags: <defaults>
</compile_context>

<pallas_src>
import functools

import jax
import jax.numpy as jnp
from jax.experimental import pallas as pl
from jax.experimental.pallas import tpu as pltpu


_ROW_ALIGN = 32          # int8-output sublane packing (32,128); also covers f32/bf16/int8 inputs.
_DEF_COL_CHUNK = 128     # output columns per in-kernel MXU compaction step (contraction <= 512)


# ----------------------------------------------------------------------------
# Pallas kernel
# ----------------------------------------------------------------------------
def _relational_mask_kernel(rel_ref, out_ref, *, n_rel, n_cols, col_chunk,
                            fast_path, acc_dtype):
    """rel_ref: (TM, N*K) native-layout block (lane-dense); out_ref: (TM, N) int8."""
    n_chunks = (n_cols + col_chunk - 1) // col_chunk
    mats = {}

    def group_matrix(wv, csz):
        # Tiny {0,1} bf16 matrix generated once per distinct chunk shape
        # (hoisted out of the chunk loop via memoization; VPU cost negligible).
        key = (wv, csz)
        if key not in mats:
            r = jax.lax.broadcasted_iota(jnp.int32, (wv, csz), 0)
            c = jax.lax.broadcasted_iota(jnp.int32, (wv, csz), 1) * n_rel
            if fast_path:
                sel = (r >= c) & (r < c + n_rel)   # K ones per column -> group sum on MXU
            else:
                sel = r == c                       # single pick at lane j*K -> lane compaction
            mats[key] = sel.astype(jnp.bfloat16)
        return mats[key]

    for chunk in range(n_chunks):
        j0 = chunk * col_chunk
        csz = min(col_chunk, n_cols - j0)
        base = j0 * n_rel
        if fast_path:
            # Dtypes exactly representable in bf16 (int8/uint8/bool/bf16):
            # group-sum directly on the MXU with f32 accumulation (exact).
            wv = csz * n_rel
            m = rel_ref[:, base:base + wv].astype(jnp.bfloat16)
        else:
            # General dtypes (f32/...): exact VPU window-sum via K shifted VMEM
            # loads (same accumulation order as the reference), threshold, then
            # MXU lane compaction with a {0,1} pick matrix (exact).
            wv = csz * n_rel - (n_rel - 1)
            y = rel_ref[:, base:base + wv].astype(acc_dtype)
            for s in range(1, n_rel):
                y = y + rel_ref[:, base + s:base + s + wv].astype(acc_dtype)
            m = (y > 0).astype(jnp.bfloat16)
        g = jnp.dot(m, group_matrix(wv, csz), preferred_element_type=jnp.float32)
        out_ref[:, j0:j0 + csz] = (g > 0).astype(out_ref.dtype)


# ----------------------------------------------------------------------------
# Tiling / VMEM heuristics
# ----------------------------------------------------------------------------
def _vmem_budget():
    """Generation-aware (v5e/v6e: 128 MiB, v7x: 64 MiB per TC) VMEM budget/limit."""
    cap = None
    try:
        cap = getattr(pltpu.get_tpu_info(), "vmem_capacity_bytes", None)
    except Exception:
        cap = None
    if not cap or cap <= 0:
        cap = 64 * 1024 * 1024            # conservative fallback (v7x-sized)
    budget = int(cap * 0.45)              # working-set target (headroom for Mosaic scratch)
    limit = max(32 * 1024 * 1024, min(int(cap * 0.75), 112 * 1024 * 1024))
    return budget, limit


def _choose_tile_rows(n_rows, lane_elems, n_cols, in_itemsize, col_chunk, n_rel,
                      budget_bytes, tile_rows):
    if tile_rows is not None:
        tm = min(int(tile_rows), n_rows)
        if tm < n_rows:
            tm = min(n_rows, max(_ROW_ALIGN, (tm // _ROW_ALIGN) * _ROW_ALIGN))
        return max(1, tm)

    per_row = (2 * lane_elems * in_itemsize      # double-buffered input block
               + 2 * n_cols                      # double-buffered int8 output block
               + 6 * col_chunk * n_rel * 4)      # in-kernel chunk temporaries (f32-ish)
    tm = max(1, budget_bytes // per_row)
    if n_rows >= 2 * _ROW_ALIGN:
        # Keep >= 2 row blocks so the ("parallel",) grid axis can split across
        # TensorCores (v7x megacore) instead of pinning the kernel on one core.
        tm = min(tm, max(_ROW_ALIGN, ((n_rows // 2) // _ROW_ALIGN) * _ROW_ALIGN))
    if tm >= n_rows:
        return n_rows
    return min(n_rows, max(_ROW_ALIGN, (tm // _ROW_ALIGN) * _ROW_ALIGN))


# ----------------------------------------------------------------------------
# Pallas entry point + dispatcher
# ----------------------------------------------------------------------------
@functools.partial(jax.jit, static_argnames=("tile_rows", "col_chunk"))
def relational_mask_pallas(relational_encoding, tile_rows=None,
                           col_chunk=_DEF_COL_CHUNK):
    """(relational_encoding.sum(-1) > 0) as int8, computed on TPU via Pallas."""
    x = relational_encoding
    if x.dtype == jnp.bool_:
        x = x.astype(jnp.int8)
    n_rows, n_cols, n_rel = x.shape
    itemsize = jnp.dtype(x.dtype).itemsize
    lane_elems = n_cols * n_rel

    fast_path = x.dtype in (jnp.dtype(jnp.int8), jnp.dtype(jnp.uint8),
                            jnp.dtype(jnp.bfloat16))
    acc_dtype = jnp.int32 if jnp.issubdtype(x.dtype, jnp.integer) else jnp.float32

    # Free, contiguous view: merge the two minor dims -> lane-dense (N, N*K).
    x2d = x.reshape(n_rows, lane_elems)

    budget, vmem_limit = _vmem_budget()
    tm = _choose_tile_rows(n_rows, lane_elems, n_cols, itemsize, col_chunk,
                           n_rel, budget, tile_rows)
    grid = (pl.cdiv(n_rows, tm),)

    kernel = functools.partial(
        _relational_mask_kernel,
        n_rel=n_rel,
        n_cols=n_cols,
        col_chunk=min(col_chunk, n_cols),
        fast_path=fast_path,
        acc_dtype=acc_dtype,
    )

    return pl.pallas_call(
        kernel,
        out_shape=jax.ShapeDtypeStruct((n_rows, n_cols), jnp.int8),
        grid=grid,
        in_specs=[pl.BlockSpec((tm, lane_elems), lambda i: (i, 0))],
        out_specs=pl.BlockSpec((tm, n_cols), lambda i: (i, 0)),
        compiler_params=pltpu.CompilerParams(
            dimension_semantics=("parallel",),
            vmem_limit_bytes=vmem_limit,
        ),
    )(x2d)


def relational_mask(relational_encoding, *, tile_rows=None,
                    col_chunk=_DEF_COL_CHUNK,
                    min_pallas_bytes=4 * 1024 * 1024):
    """Dispatch: tiny inputs use the fused XLA reduce (launch overhead dominates);
    larger inputs use the single-pass Pallas kernel (same minimal HBM traffic)."""
    x = jnp.asarray(relational_encoding)
    if x.ndim != 3:
        raise ValueError(f"expected (N, N, K) relational_encoding, got {x.shape}")
    total_bytes = x.size * jnp.dtype(x.dtype).itemsize
    if total_bytes < min_pallas_bytes:
        return (jnp.sum(x, axis=-1) > 0).astype(jnp.int8)
    return relational_mask_pallas(x, tile_rows=tile_rows, col_chunk=col_chunk)


# ----------------------------------------------------------------------------
# Module wrapper
# ----------------------------------------------------------------------------
class RelationalEmbeddingJAX:
    """JAX/Pallas port of the concrete parts of the PyTorch RelationalEmbedding ABC.

    Note: `relational_mask` is int8 {0,1} (the PyTorch reference produces int64);
    cast at the consumer if a wider integer dtype is required.
    """

    def __init__(self, seq_output_shape, relational_encoding, k_hops,
                 tile_rows=None, min_pallas_bytes=4 * 1024 * 1024):
        self.seq_output_shape = seq_output_shape          # (N, seq_embed_size)
        self.relational_encoding = jnp.asarray(relational_encoding)
        self.k_hops = k_hops
        # Hot path: mask construction runs in the Pallas kernel for non-tiny inputs.
        self.relational_mask = relational_mask(
            self.relational_encoding,
            tile_rows=tile_rows,
            min_pallas_bytes=min_pallas_bytes,
        )

    def output_shape(self):
        N, seq_embed_size = self.seq_output_shape
        return (N, seq_embed_size)

    def config(self):
        # TODO(synk): abstract in the reference module; no semantics to translate.
        raise NotImplementedError("config is abstract in RelationalEmbedding")

    def forward(self, seq_embed):
        # TODO(synk): abstract in the reference module; no forward semantics to implement.
        raise NotImplementedError("forward is abstract in RelationalEmbedding")


# ----------------------------------------------------------------------------
# Demo / self-test
# ----------------------------------------------------------------------------
if __name__ == "__main__":
    key = jax.random.PRNGKey(0)
    N = 256               # number of stocks / nodes
    K = 4                 # possible relationship types per node pair
    seq_embed_size = 32
    k_hops = 2

    # Deterministic synthetic relational encoding: sparse {0,1} tensor (N, N, K).
    u = jax.random.uniform(key, (N, N, K), dtype=jnp.float32)
    rel_f32 = (u > 0.7).astype(jnp.float32)

    # Module wrapper, row-tiled pipelined path (tile_rows=64 -> grid=(4,)).
    model = RelationalEmbeddingJAX(
        seq_output_shape=(N, seq_embed_size),
        relational_encoding=rel_f32,
        k_hops=k_hops,
        tile_rows=64,
        min_pallas_bytes=0,    # force the Pallas path at this small demo size
    )
    mask_tiled = jax.block_until_ready(model.relational_mask)

    # Auto-sized tiles (>= 2 row blocks), f32 exact-sum path.
    mask_auto = jax.block_until_ready(relational_mask_pallas(rel_f32))

    # int8 input: narrow-dtype fast path (group-sum directly on the MXU).
    rel_i8 = rel_f32.astype(jnp.int8)
    mask_i8 = jax.block_until_ready(relational_mask_pallas(rel_i8))

    # Pure-JAX reference check.
    ref = (jnp.sum(rel_f32, axis=-1) > 0).astype(jnp.int8)
    assert mask_tiled.shape == (N, N), mask_tiled.shape
    assert mask_tiled.dtype == jnp.int8, mask_tiled.dtype
    assert bool(jnp.array_equal(mask_tiled, ref)), "Pallas mask (tiled f32) mismatch"
    assert bool(jnp.array_equal(mask_auto, ref)), "Pallas mask (auto f32) mismatch"
    assert bool(jnp.array_equal(mask_i8, ref)), "Pallas mask (int8 fast path) mismatch"
    assert model.output_shape() == (N, seq_embed_size)

    print("KERNEL_OK")
</pallas_src>

<mosaic_0001>
module attributes {stable_mosaic.version = 11 : i64} {
  func.func @_relational_mask_kernel(%arg0: i32, %arg1: memref<64x1024xf32, #tpu.memory_space<vmem>>, %arg2: memref<64x256xi8, #tpu.memory_space<vmem>>) attributes {dimension_semantics = [#tpu.dimension_semantics<parallel>], iteration_bounds = array<i64: 4>, scalar_prefetch = 0 : i64, scratch_operands = 0 : i64, tpu.core_type = #tpu.core_type<tc>, window_params = [{transform_indices = @transform_0, window_bounds = array<i64: 64, 1024>}, {transform_indices = @transform_1, window_bounds = array<i64: 64, 256>}]} {
    %c0 = arith.constant 0 : index
    %c0_0 = arith.constant 0 : index
    %0 = vector.load %arg1[%c0, %c0_0] : memref<64x1024xf32, #tpu.memory_space<vmem>>, vector<64x509xf32>
    %c0_1 = arith.constant 0 : index
    %c1 = arith.constant 1 : index
    %1 = vector.load %arg1[%c0_1, %c1] : memref<64x1024xf32, #tpu.memory_space<vmem>>, vector<64x509xf32>
    %2 = arith.addf %0, %1 : vector<64x509xf32>
    %c0_2 = arith.constant 0 : index
    %c2 = arith.constant 2 : index
    %3 = vector.load %arg1[%c0_2, %c2] : memref<64x1024xf32, #tpu.memory_space<vmem>>, vector<64x509xf32>
    %4 = arith.addf %2, %3 : vector<64x509xf32>
    %c0_3 = arith.constant 0 : index
    %c3 = arith.constant 3 : index
    %5 = vector.load %arg1[%c0_3, %c3] : memref<64x1024xf32, #tpu.memory_space<vmem>>, vector<64x509xf32>
    %6 = arith.addf %4, %5 : vector<64x509xf32>
    %cst = arith.constant 0.000000e+00 : f32
    %7 = vector.broadcast %cst : f32 to vector<64x509xf32>
    %8 = arith.cmpf ogt, %6, %7 : vector<64x509xf32>
    %9 = arith.extui %8 : vector<64x509xi1> to vector<64x509xi32>
    %10 = arith.sitofp %9 : vector<64x509xi32> to vector<64x509xf32>
    %11 = arith.truncf %10 : vector<64x509xf32> to vector<64x509xbf16>
    %12 = tpu.iota {dimensions = array<i32: 0>} : vector<509x128xi32>
    %13 = tpu.iota {dimensions = array<i32: 1>} : vector<509x128xi32>
    %c4_i32 = arith.constant 4 : i32
    %14 = vector.broadcast %c4_i32 : i32 to vector<509x128xi32>
    %15 = arith.muli %13, %14 : vector<509x128xi32>
    %16 = arith.cmpi eq, %12, %15 : vector<509x128xi32>
    %17 = arith.extui %16 : vector<509x128xi1> to vector<509x128xi32>
    %18 = arith.sitofp %17 : vector<509x128xi32> to vector<509x128xf32>
    %19 = arith.truncf %18 : vector<509x128xf32> to vector<509x128xbf16>
    %cst_4 = arith.constant dense<0.000000e+00> : vector<64x128xf32>
    %20 = tpu.matmul %11, %19, %cst_4 {dimension_numbers = #tpu.dot_dimension_numbers<[1], [0], [0], [1], [0, 0, 1, 1], [], []>} : vector<64x509xbf16>, vector<509x128xbf16>, vector<64x128xf32> -> vector<64x128xf32>
    %cst_5 = arith.constant 0.000000e+00 : f32
    %21 = vector.broadcast %cst_5 : f32 to vector<64x128xf32>
    %22 = arith.cmpf ogt, %20, %21 : vector<64x128xf32>
    %23 = arith.extui %22 : vector<64x128xi1> to vector<64x128xi8>
    %c0_6 = arith.constant 0 : index
    %c0_7 = arith.constant 0 : index
    %24 = vector.load %arg2[%c0_6, %c0_7] : memref<64x256xi8, #tpu.memory_space<vmem>>, vector<64x128xi8>
    tpu.vector_store %arg2[%c0_6, %c0_7], %23 {strides = array<i32>} : memref<64x256xi8, #tpu.memory_space<vmem>>, vector<64x128xi8>,
    %c0_8 = arith.constant 0 : index
    %c512 = arith.constant 512 : index
    %25 = vector.load %arg1[%c0_8, %c512] : memref<64x1024xf32, #tpu.memory_space<vmem>>, vector<64x509xf32>
    %c0_9 = arith.constant 0 : index
    %c513 = arith.constant 513 : index
    %26 = vector.load %arg1[%c0_9, %c513] : memref<64x1024xf32, #tpu.memory_space<vmem>>, vector<64x509xf32>
    %27 = arith.addf %25, %26 : vector<64x509xf32>
    %c0_10 = arith.constant 0 : index
    %c514 = arith.constant 514 : index
    %28 = vector.load %arg1[%c0_10, %c514] : memref<64x1024xf32, #tpu.memory_space<vmem>>, vector<64x509xf32>
    %29 = arith.addf %27, %28 : vector<64x509xf32>
    %c0_11 = arith.constant 0 : index
    %c515 = arith.constant 515 : index
    %30 = vector.load %arg1[%c0_11, %c515] : memref<64x1024xf32, #tpu.memory_space<vmem>>, vector<64x509xf32>
    %31 = arith.addf %29, %30 : vector<64x509xf32>
    %cst_12 = arith.constant 0.000000e+00 : f32
    %32 = vector.broadcast %cst_12 : f32 to vector<64x509xf32>
    %33 = arith.cmpf ogt, %31, %32 : vector<64x509xf32>
    %34 = arith.extui %33 : vector<64x509xi1> to vector<64x509xi32>
    %35 = arith.sitofp %34 : vector<64x509xi32> to vector<64x509xf32>
    %36 = arith.truncf %35 : vector<64x509xf32> to vector<64x509xbf16>
    %cst_13 = arith.constant dense<0.000000e+00> : vector<64x128xf32>
    %37 = tpu.matmul %36, %19, %cst_13 {dimension_numbers = #tpu.dot_dimension_numbers<[1], [0], [0], [1], [0, 0, 1, 1], [], []>} : vector<64x509xbf16>, vector<509x128xbf16>, vector<64x128xf32> -> vector<64x128xf32>
    %cst_14 = arith.constant 0.000000e+00 : f32
    %38 = vector.broadcast %cst_14 : f32 to vector<64x128xf32>
    %39 = arith.cmpf ogt, %37, %38 : vector<64x128xf32>
    %40 = arith.extui %39 : vector<64x128xi1> to vector<64x128xi8>
    %c0_15 = arith.constant 0 : index
    %c128 = arith.constant 128 : index
    %41 = vector.load %arg2[%c0_15, %c128] : memref<64x256xi8, #tpu.memory_space<vmem>>, vector<64x128xi8>
    tpu.vector_store %arg2[%c0_15, %c128], %40 {strides = array<i32>} : memref<64x256xi8, #tpu.memory_space<vmem>>, vector<64x128xi8>,
    return
  }
  func.func @transform_0(%arg0: i32) -> (i32, i32) {
    %c0_i32 = arith.constant 0 : i32
    %c0_i32_0 = arith.constant 0 : i32
    return %arg0, %c0_i32 : i32, i32
  }
  func.func @transform_1(%arg0: i32) -> (i32, i32) {
    %c0_i32 = arith.constant 0 : i32
    %c0_i32_0 = arith.constant 0 : i32
    return %arg0, %c0_i32 : i32, i32
  }
}

</mosaic_0001>

<llo_original>
// kernel: relational_mask_pallas.1
$region0: #{relational_mask_pallas.1}
  #allocation0 [shape = 'u32[]', space=smem, size = 0x4, offset = 0x4, fixed_abs, tag = 'smem constant byte address 0x4 - core index']
  #allocation1 [shape = 'u32[72,128]{1,0:T(1,128)}', space=vmem, size = 0x9000, scoped, tag = 'internal scratch']
  %s0 = inlined_call_operand.vmem [shape: f32[256,1024], index: 0, kind: input, shape index: {}]
  %s1 = inlined_call_operand.hbm [shape: s8[256,256], index: 1, kind: output, shape index: {}]
  %s2 = sld [smem:[#allocation0]]
  $region37: #{relational_mask_pallas.1} parent=0
    _
  %s4 = ssub.s32 1, %s2
  %s5 = scalar_select 0, %s4, %s2
  $region1: #{relational_mask_pallas.1} parent=0
    #allocation2 [shape = 'u8[32768]{0}', space=vmem, size = 0x8000, scoped, tag = 'output window, operand 0']
    #allocation3 [shape = 's32[2]{0}', space=sflag, size = 0x8, scoped, tag = 'scoped memory for relational_mask_pallas.1']
    %6 = vsyncpa [#allocation3], 0
    %s7 = scalar_lea.sflag [#allocation3], 1
    %8 = vsyncpa %s7, 0
    loop: start=0, step=1, limit=6
    $region2: #{relational_mask_pallas.1} parent=1 // loop_pre_header
      _
    $region3: #{relational_mask_pallas.1} parent=1 // loop_header
      %s10 = sphi 0, %s14
      %p11 = scmp.ge.s32.totalorder %s10, 6
      %s20 = sphi 0, %s22
      %s23 = sphi 0, %s20
      %s24 = sphi 0, %s23
      %s40 = sphi 0, %s24
      %s46 = sphi 0, %s48
      %s49 = sphi 0, %s46
      %s50 = sphi 0, %s49
      %s66 = sphi 0, %s50
    $region4: #{relational_mask_pallas.1} parent=1 // loop_header_branch
      %13 = sbr.rel (%p11) target = $region8
    $region5: #{relational_mask_pallas.1} parent=1 // loop_body
      %s15 = ssub.s32 %s10, 1
      %s16 = ssub.s32 %s10, 2
      %s17 = sadd.s32 %s10, 1
      %s18 = ssub.s32 %s10, %s17
      %p19 = scmp.eq.s32.totalorder %s18, 0
      %s21 = sadd.s32 %s20, 1
      %s22 = scalar_select %p19, %s20, %s21
      %p25 = pneg %p19
      %p26 = scmp.eq.s32.totalorder %s10, 3
      %p27 = por %p25, %p26
      %p28 = scmp.ne.s32.totalorder %s20, %s23
      %p29 = scmp.eq.s32.totalorder %s10, 0
      %p30 = por %p28, %p29
      %p31 = scmp.ne.s32.totalorder %s20, %s23
      %p32 = scmp.eq.s32.totalorder %s15, 3
      %p33 = por %p31, %p32
      %p34 = scmp.ne.s32.totalorder %s23, %s24
      %p35 = scmp.eq.s32.totalorder %s15, 0
      %p36 = por %p34, %p35
      %p37 = scmp.ne.s32.totalorder %s23, %s24
      %p38 = scmp.eq.s32.totalorder %s16, 3
      %p39 = por %p37, %p38
      %p41 = scmp.ne.s32.totalorder %s24, %s40
      %p42 = scmp.eq.s32.totalorder %s16, 0
      %p43 = por %p41, %p42
      %s44 = ssub.s32 %s10, %s17
      %p45 = scmp.eq.s32.totalorder %s44, 0
      %s47 = sadd.s32 %s46, 1
      %s48 = scalar_select %p45, %s46, %s47
      %p51 = pneg %p45
      %p52 = scmp.eq.s32.totalorder %s10, 3
      %p53 = por %p51, %p52
      %p54 = scmp.ne.s32.totalorder %s46, %s49
      %p55 = scmp.eq.s32.totalorder %s10, 0
      %p56 = por %p54, %p55
      %p57 = scmp.ne.s32.totalorder %s46, %s49
      %p58 = scmp.eq.s32.totalorder %s15, 3
      %p59 = por %p57, %p58
      %p60 = scmp.ne.s32.totalorder %s49, %s50
      %p61 = scmp.eq.s32.totalorder %s15, 0
      %p62 = por %p60, %p61
      %p63 = scmp.ne.s32.totalorder %s49, %s50
      %p64 = scmp.eq.s32.totalorder %s16, 3
      %p65 = por %p63, %p64
      %p67 = scmp.ne.s32.totalorder %s50, %s66
      %p68 = scmp.eq.s32.totalorder %s16, 0
      %p69 = por %p67, %p68
      %p70 = scmp.le.s32.totalorder 1, %s10
      %p71 = scmp.lt.s32.totalorder %s10, 5
      %p72 = pnand %p70, %p71
      %p73 = pneg %p72
      // Predicated region
      $region9: #{relational_mask_pallas.1} parent=5 // pred_check
        _
      $region10: #{relational_mask_pallas.1} parent=5 // pred_check_branch
        %75 = sbr.rel (%p72) target = $region12
      $region11: #{relational_mask_pallas.1} parent=5 // pred_region
        %s76 = ssub.s32 %s10, 1
      $region12: #{relational_mask_pallas.1} parent=5 // pred_fallthru
        _
      %p77 = scmp.lt.s32.totalorder %s10, 4
      // Predicated region
      $region13: #{relational_mask_pallas.1} parent=5 // pred_check
        %p78 = pneg %p77
      $region14: #{relational_mask_pallas.1} parent=5 // pred_check_branch
        %80 = sbr.rel (%p78) target = $region16
      $region15: #{relational_mask_pallas.1} parent=5 // pred_region
        // Predicated region
        $region17: #{relational_mask_pallas.1} parent=15 // pred_check
          %p81 = pneg %p30
        $region18: #{relational_mask_pallas.1} parent=15 // pred_check_branch
          %83 = sbr.rel (%p81) target = $region20
        $region19: #{relational_mask_pallas.1} parent=15 // pred_region
          %s84 = smul.u32 8, %s10
          %p85 = scmp.lt.s32.totalorder %s84, 31
          %s86 = scalar_select %p85, %s84, 31
          %s87 = smul.addr %s86, 8
          %s88 = smul.addr %s87, 8
          %s89 = scalar_lea.vmem %s0, %s88
          %s90 = smul.u32 8, %s10
        $region20: #{relational_mask_pallas.1} parent=15 // pred_fallthru
          _
      $region16: #{relational_mask_pallas.1} parent=5 // pred_fallthru
        _
      %p91 = scmp.le.s32.totalorder 1, %s10
      %p92 = scmp.lt.s32.totalorder %s10, 5
      %p93 = pnand %p91, %p92
      %p94 = pneg %p93
      // Predicated region
      $region21: #{relational_mask_pallas.1} parent=5 // pred_check
        _
      $region22: #{relational_mask_pallas.1} parent=5 // pred_check_branch
        %96 = sbr.rel (%p93) target = $region24
      $region23: #{relational_mask_pallas.1} parent=5 // pred_region
        %s97 = ssub.s32 %s10, 1
        %s98 = smul.u32 8, %s15
        %p99 = scmp.lt.s32.totalorder %s98, 31
        %s100 = scalar_select %p99, %s98, 31
        %s101 = smul.addr %s100, 8
        %s102 = smul.addr %s101, 8
        %s103 = scalar_lea.vmem %s0, %s102
        %p104 = pneg %p36
        %p105 = pneg %p33
        %p106 = pneg %p62
        %p107 = pneg %p59
        %s108 = sand.u32 %s49, 1
        %s109 = scalar_lea.sflag [#allocation3], %s108
        %s110 = sand.u32 %s49, 1
        %s111 = smul.addr %s110, 32
        %s112 = scalar_lea.vmem [#allocation2], %s111
        %s113 = smul.u32 8, %s15
        %p114 = scmp.lt.s32.totalorder %s113, 31
        %s115 = scalar_select %p114, %s113, 31
        %s116 = smul.addr %s115, 8
        %s117 = smul.addr %s116, 8
        %s118 = scalar_lea.vmem %s0, %s117
        %s119 = smul.u32 8, %s15
        %s120 = smul.u32 2, %s15
        %v123 = vld [vmem:[%s118] sm:$0xff]
        %v124 = vld [vmem:[%s118 + $0x8] sm:$0xff]
        %v125 = vld [vmem:[%s118 + $0x10] sm:$0xff]
        %v126 = vld [vmem:[%s118 + $0x18] sm:$0xff]
        %v127 = vld [vmem:[%s118 + $0x40] sm:$0xff]
        %v128 = vld [vmem:[%s118 + $0x48] sm:$0xff]
        %v129 = vld [vmem:[%s118 + $0x50] sm:$0xff]
        %v130 = vld [vmem:[%s118 + $0x58] sm:$0xff]
        %v131 = vld [vmem:[%s118 + $0x80] sm:$0xff]
        %v132 = vld [vmem:[%s118 + $0x88] sm:$0xff]
        %v133 = vld [vmem:[%s118 + $0x90] sm:$0xff]
        %v134 = vld [vmem:[%s118 + $0x98] sm:$0xff]
        %v135 = vld [vmem:[%s118 + $0xc0] sm:$0xff]
        %v136 = vld [vmem:[%s118 + $0xc8] sm:$0xff]
        %v137 = vld [vmem:[%s118 + $0xd0] sm:$0xff]
        %v138 = vld [vmem:[%s118 + $0xd8] sm:$0xff]
        %v139 = vld [vmem:[%s118 + $0x100] sm:$0xff]
        %v140 = vld [vmem:[%s118 + $0x108] sm:$0xff]
        %v141 = vld [vmem:[%s118 + $0x110] sm:$0xff]
        %v142 = vld [vmem:[%s118 + $0x118] sm:$0xff]
        %v143 = vld [vmem:[%s118 + $0x140] sm:$0xff]
        %v144 = vld [vmem:[%s118 + $0x148] sm:$0xff]
        %v145 = vld [vmem:[%s118 + $0x150] sm:$0xff]
        %v146 = vld [vmem:[%s118 + $0x158] sm:$0xff]
        %v147 = vld [vmem:[%s118 + $0x180] sm:$0xff]
        %v148 = vld [vmem:[%s118 + $0x188] sm:$0xff]
        %v149 = vld [vmem:[%s118 + $0x190] sm:$0xff]
        %v150 = vld [vmem:[%s118 + $0x198] sm:$0xff]
        %v151 = vld [vmem:[%s118 + $0x1c0] sm:$0xff]
        %v152 = vld [vmem:[%s118 + $0x1c8] sm:$0xff]
        %v153 = vld [vmem:[%s118 + $0x1d0] sm:$0xff]
        %v154 = vld [vmem:[%s118 + $0x1d8] sm:$0xff]
        %187 = vrot.lane.b32.xlu0 %v123, 127
        %v188 = vpop.permute.xlu0 %187
        %189 = vrot.lane.b32.xlu0 %v124, 127
        %v190 = vpop.permute.xlu0 %189
        %191 = vrot.lane.b32.xlu0 %v125, 127
        %v192 = vpop.permute.xlu0 %191
        %193 = vrot.lane.b32.xlu0 %v126, 127
        %v194 = vpop.permute.xlu0 %193
        %195 = vrot.lane.b32.xlu0 %v127, 127
        %v196 = vpop.permute.xlu0 %195
        %197 = vrot.lane.b32.xlu0 %v128, 127
        %v198 = vpop.permute.xlu0 %197
        %199 = vrot.lane.b32.xlu0 %v129, 127
        %v200 = vpop.permute.xlu0 %199
        %201 = vrot.lane.b32.xlu0 %v130, 127
        %v202 = vpop.permute.xlu0 %201
        %203 = vrot.lane.b32.xlu0 %v131, 127
        %v204 = vpop.permute.xlu0 %203
        %205 = vrot.lane.b32.xlu0 %v132, 127
        %v206 = vpop.permute.xlu0 %205
        %207 = vrot.lane.b32.xlu0 %v133, 127
        %v208 = vpop.permute.xlu0 %207
        %209 = vrot.lane.b32.xlu0 %v134, 127
        %v210 = vpop.permute.xlu0 %209
        %211 = vrot.lane.b32.xlu0 %v135, 127
        %v212 = vpop.permute.xlu0 %211
        %213 = vrot.lane.b32.xlu0 %v136, 127
        %v214 = vpop.permute.xlu0 %213
        %215 = vrot.lane.b32.xlu0 %v137, 127
        %v216 = vpop.permute.xlu0 %215
        %217 = vrot.lane.b32.xlu0 %v138, 127
        %v218 = vpop.permute.xlu0 %217
        %219 = vrot.lane.b32.xlu0 %v139, 127
        %v220 = vpop.permute.xlu0 %219
        %221 = vrot.lane.b32.xlu0 %v140, 127
        %v222 = vpop.permute.xlu0 %221
        %223 = vrot.lane.b32.xlu0 %v141, 127
        %v224 = vpop.permute.xlu0 %223
        %225 = vrot.lane.b32.xlu0 %v142, 127
        %v226 = vpop.permute.xlu0 %225
        %227 = vrot.lane.b32.xlu0 %v143, 127
        %v228 = vpop.permute.xlu0 %227
        %229 = vrot.lane.b32.xlu0 %v144, 127
        %v230 = vpop.permute.xlu0 %229
        %231 = vrot.lane.b32.xlu0 %v145, 127
        %v232 = vpop.permute.xlu0 %231
        %233 = vrot.lane.b32.xlu0 %v146, 127
        %v234 = vpop.permute.xlu0 %233
        %235 = vrot.lane.b32.xlu0 %v147, 127
        %v236 = vpop.permute.xlu0 %235
        %237 = vrot.lane.b32.xlu0 %v148, 127
        %v238 = vpop.permute.xlu0 %237
        %239 = vrot.lane.b32.xlu0 %v149, 127
        %v240 = vpop.permute.xlu0 %239
        %241 = vrot.lane.b32.xlu0 %v150, 127
        %v242 = vpop.permute.xlu0 %241
        %243 = vrot.lane.b32.xlu0 %v151, 127
        %v244 = vpop.permute.xlu0 %243
        %245 = vrot.lane.b32.xlu0 %v152, 127
        %v246 = vpop.permute.xlu0 %245
        %247 = vrot.lane.b32.xlu0 %v153, 127
        %v248 = vpop.permute.xlu0 %247
        %249 = vrot.lane.b32.xlu0 %v154, 127
        %v250 = vpop.permute.xlu0 %249
        %vm251 = vcmask 1039360
        %v252 = vsel %vm251, %v188, %v190
        %v253 = vsel %vm251, %v190, %v192
        %v254 = vsel %vm251, %v192, %v194
        %v255 = vsel %vm251, %v196, %v198
        %v256 = vsel %vm251, %v198, %v200
        %v257 = vsel %vm251, %v200, %v202
        %v258 = vsel %vm251, %v204, %v206
        %v259 = vsel %vm251, %v206, %v208
        %v260 = vsel %vm251, %v208, %v210
        %v261 = vsel %vm251, %v212, %v214
        %v262 = vsel %vm251, %v214, %v216
        %v263 = vsel %vm251, %v216, %v218
        %v264 = vsel %vm251, %v220, %v222
        %v265 = vsel %vm251, %v222, %v224
        %v266 = vsel %vm251, %v224, %v226
        %v267 = vsel %vm251, %v228, %v230
        %v268 = vsel %vm251, %v230, %v232
        %v269 = vsel %vm251, %v232, %v234
        %v270 = vsel %vm251, %v236, %v238
        %v271 = vsel %vm251, %v238, %v240
        %v272 = vsel %vm251, %v240, %v242
        %v273 = vsel %vm251, %v244, %v246
        %v274 = vsel %vm251, %v246, %v248
        %v275 = vsel %vm251, %v248, %v250
        %v308 = vadd.f32 %v123, %v252
        %v309 = vadd.f32 %v124, %v253
        %v310 = vadd.f32 %v125, %v254
        %v311 = vadd.f32 %v126, %v194
        %v312 = vadd.f32 %v127, %v255
        %v313 = vadd.f32 %v128, %v256
        %v314 = vadd.f32 %v129, %v257
        %v315 = vadd.f32 %v130, %v202
        %v316 = vadd.f32 %v131, %v258
        %v317 = vadd.f32 %v132, %v259
        %v318 = vadd.f32 %v133, %v260
        %v319 = vadd.f32 %v134, %v210
        %v320 = vadd.f32 %v135, %v261
        %v321 = vadd.f32 %v136, %v262
        %v322 = vadd.f32 %v137, %v263
        %v323 = vadd.f32 %v138, %v218
        %v324 = vadd.f32 %v139, %v264
        %v325 = vadd.f32 %v140, %v265
        %v326 = vadd.f32 %v141, %v266
        %v327 = vadd.f32 %v142, %v226
        %v328 = vadd.f32 %v143, %v267
        %v329 = vadd.f32 %v144, %v268
        %v330 = vadd.f32 %v145, %v269
        %v331 = vadd.f32 %v146, %v234
        %v332 = vadd.f32 %v147, %v270
        %v333 = vadd.f32 %v148, %v271
        %v334 = vadd.f32 %v149, %v272
        %v335 = vadd.f32 %v150, %v242
        %v336 = vadd.f32 %v151, %v273
        %v337 = vadd.f32 %v152, %v274
        %v338 = vadd.f32 %v153, %v275
        %v339 = vadd.f32 %v154, %v250
        %340 = vrot.lane.b32.xlu0 %v123, 126
        %v341 = vpop.permute.xlu0 %340
        %342 = vrot.lane.b32.xlu0 %v124, 126
        %v343 = vpop.permute.xlu0 %342
        %344 = vrot.lane.b32.xlu0 %v125, 126
        %v345 = vpop.permute.xlu0 %344
        %346 = vrot.lane.b32.xlu0 %v126, 126
        %v347 = vpop.permute.xlu0 %346
        %348 = vrot.lane.b32.xlu0 %v127, 126
        %v349 = vpop.permute.xlu0 %348
        %350 = vrot.lane.b32.xlu0 %v128, 126
        %v351 = vpop.permute.xlu0 %350
        %352 = vrot.lane.b32.xlu0 %v129, 126
        %v353 = vpop.permute.xlu0 %352
        %354 = vrot.lane.b32.xlu0 %v130, 126
        %v355 = vpop.permute.xlu0 %354
        %356 = vrot.lane.b32.xlu0 %v131, 126
        %v357 = vpop.permute.xlu0 %356
        %358 = vrot.lane.b32.xlu0 %v132, 126
        %v359 = vpop.permute.xlu0 %358
        %360 = vrot.lane.b32.xlu0 %v133, 126
        %v361 = vpop.permute.xlu0 %360
        %362 = vrot.lane.b32.xlu0 %v134, 126
        %v363 = vpop.permute.xlu0 %362
        %364 = vrot.lane.b32.xlu0 %v135, 126
        %v365 = vpop.permute.xlu0 %364
        %366 = vrot.lane.b32.xlu0 %v136, 126
        %v367 = vpop.permute.xlu0 %366
        %368 = vrot.lane.b32.xlu0 %v137, 126
        %v369 = vpop.permute.xlu0 %368
        %370 = vrot.lane.b32.xlu0 %v138, 126
        %v371 = vpop.permute.xlu0 %370
        %372 = vrot.lane.b32.xlu0 %v139, 126
        %v373 = vpop.permute.xlu0 %372
        %374 = vrot.lane.b32.xlu0 %v140, 126
        %v375 = vpop.permute.xlu0 %374
        %376 = vrot.lane.b32.xlu0 %v141, 126
        %v377 = vpop.permute.xlu0 %376
        %378 = vrot.lane.b32.xlu0 %v142, 126
        %v379 = vpop.permute.xlu0 %378
        %380 = vrot.lane.b32.xlu0 %v143, 126
        %v381 = vpop.permute.xlu0 %380
        %382 = vrot.lane.b32.xlu0 %v144, 126
        %v383 = vpop.permute.xlu0 %382
        %384 = vrot.lane.b32.xlu0 %v145, 126
        %v385 = vpop.permute.xlu0 %384
        %386 = vrot.lane.b32.xlu0 %v146, 126
        %v387 = vpop.permute.xlu0 %386
        %388 = vrot.lane.b32.xlu0 %v147, 126
        %v389 = vpop.permute.xlu0 %388
        %390 = vrot.lane.b32.xlu0 %v148, 126
        %v391 = vpop.permute.xlu0 %390
        %392 = vrot.lane.b32.xlu0 %v149, 126
        %v393 = vpop.permute.xlu0 %392
        %394 = vrot.lane.b32.xlu0 %v150, 126
        %v395 = vpop.permute.xlu0 %394
        %396 = vrot.lane.b32.xlu0 %v151, 126
        %v397 = vpop.permute.xlu0 %396
        %398 = vrot.lane.b32.xlu0 %v152, 126
        %v399 = vpop.permute.xlu0 %398
        %400 = vrot.lane.b32.xlu0 %v153, 126
        %v401 = vpop.permute.xlu0 %400
        %402 = vrot.lane.b32.xlu0 %v154, 126
        %v403 = vpop.permute.xlu0 %402
        %vm404 = vcmask 1031168
        %v405 = vsel %vm404, %v341, %v343
        %v406 = vsel %vm404, %v343, %v345
        %v407 = vsel %vm404, %v345, %v347
        %v408 = vsel %vm404, %v349, %v351
        %v409 = vsel %vm404, %v351, %v353
        %v410 = vsel %vm404, %v353, %v355
        %v411 = vsel %vm404, %v357, %v359
        %v412 = vsel %vm404, %v359, %v361
        %v413 = vsel %vm404, %v361, %v363
        %v414 = vsel %vm404, %v365, %v367
        %v415 = vsel %vm404, %v367, %v369
        %v416 = vsel %vm404, %v369, %v371
        %v417 = vsel %vm404, %v373, %v375
        %v418 = vsel %vm404, %v375, %v377
        %v419 = vsel %vm404, %v377, %v379
        %v420 = vsel %vm404, %v381, %v383
        %v421 = vsel %vm404, %v383, %v385
        %v422 = vsel %vm404, %v385, %v387
        %v423 = vsel %vm404, %v389, %v391
        %v424 = vsel %vm404, %v391, %v393
        %v425 = vsel %vm404, %v393, %v395
        %v426 = vsel %vm404, %v397, %v399
        %v427 = vsel %vm404, %v399, %v401
        %v428 = vsel %vm404, %v401, %v403
        %v461 = vadd.f32 %v308, %v405
        %v462 = vadd.f32 %v309, %v406
        %v463 = vadd.f32 %v310, %v407
        %v464 = vadd.f32 %v311, %v347
        %v465 = vadd.f32 %v312, %v408
        %v466 = vadd.f32 %v313, %v409
        %v467 = vadd.f32 %v314, %v410
        %v468 = vadd.f32 %v315, %v355
        %v469 = vadd.f32 %v316, %v411
        %v470 = vadd.f32 %v317, %v412
        %v471 = vadd.f32 %v318, %v413
        %v472 = vadd.f32 %v319, %v363
        %v473 = vadd.f32 %v320, %v414
        %v474 = vadd.f32 %v321, %v415
        %v475 = vadd.f32 %v322, %v416
        %v476 = vadd.f32 %v323, %v371
        %v477 = vadd.f32 %v324, %v417
        %v478 = vadd.f32 %v325, %v418
        %v479 = vadd.f32 %v326, %v419
        %v480 = vadd.f32 %v327, %v379
        %v481 = vadd.f32 %v328, %v420
        %v482 = vadd.f32 %v329, %v421
        %v483 = vadd.f32 %v330, %v422
        %v484 = vadd.f32 %v331, %v387
        %v485 = vadd.f32 %v332, %v423
        %v486 = vadd.f32 %v333, %v424
        %v487 = vadd.f32 %v334, %v425
        %v488 = vadd.f32 %v335, %v395
        %v489 = vadd.f32 %v336, %v426
        %v490 = vadd.f32 %v337, %v427
        %v491 = vadd.f32 %v338, %v428
        %v492 = vadd.f32 %v339, %v403
        %493 = vrot.lane.b32.xlu0 %v123, 125
        %v494 = vpop.permute.xlu0 %493
        %495 = vrot.lane.b32.xlu0 %v124, 125
        %v496 = vpop.permute.xlu0 %495
        %497 = vrot.lane.b32.xlu0 %v125, 125
        %v498 = vpop.permute.xlu0 %497
        %499 = vrot.lane.b32.xlu0 %v126, 125
        %v500 = vpop.permute.xlu0 %499
        %501 = vrot.lane.b32.xlu0 %v127, 125
        %v502 = vpop.permute.xlu0 %501
        %503 = vrot.lane.b32.xlu0 %v128, 125
        %v504 = vpop.permute.xlu0 %503
        %505 = vrot.lane.b32.xlu0 %v129, 125
        %v506 = vpop.permute.xlu0 %505
        %507 = vrot.lane.b32.xlu0 %v130, 125
        %v508 = vpop.permute.xlu0 %507
        %509 = vrot.lane.b32.xlu0 %v131, 125
        %v510 = vpop.permute.xlu0 %509
        %511 = vrot.lane.b32.xlu0 %v132, 125
        %v512 = vpop.permute.xlu0 %511
        %513 = vrot.lane.b32.xlu0 %v133, 125
        %v514 = vpop.permute.xlu0 %513
        %515 = vrot.lane.b32.xlu0 %v134, 125
        %v516 = vpop.permute.xlu0 %515
        %517 = vrot.lane.b32.xlu0 %v135, 125
        %v518 = vpop.permute.xlu0 %517
        %519 = vrot.lane.b32.xlu0 %v136, 125
        %v520 = vpop.permute.xlu0 %519
        %521 = vrot.lane.b32.xlu0 %v137, 125
        %v522 = vpop.permute.xlu0 %521
        %523 = vrot.lane.b32.xlu0 %v138, 125
        %v524 = vpop.permute.xlu0 %523
        %525 = vrot.lane.b32.xlu0 %v139, 125
        %v526 = vpop.permute.xlu0 %525
        %527 = vrot.lane.b32.xlu0 %v140, 125
        %v528 = vpop.permute.xlu0 %527
        %529 = vrot.lane.b32.xlu0 %v141, 125
        %v530 = vpop.permute.xlu0 %529
        %531 = vrot.lane.b32.xlu0 %v142, 125
        %v532 = vpop.permute.xlu0 %531
        %533 = vrot.lane.b32.xlu0 %v143, 125
        %v534 = vpop.permute.xlu0 %533
        %535 = vrot.lane.b32.xlu0 %v144, 125
        %v536 = vpop.permute.xlu0 %535
        %537 = vrot.lane.b32.xlu0 %v145, 125
        %v538 = vpop.permute.xlu0 %537
        %539 = vrot.lane.b32.xlu0 %v146, 125
        %v540 = vpop.permute.xlu0 %539
        %541 = vrot.lane.b32.xlu0 %v147, 125
        %v542 = vpop.permute.xlu0 %541
        %543 = vrot.lane.b32.xlu0 %v148, 125
        %v544 = vpop.permute.xlu0 %543
        %545 = vrot.lane.b32.xlu0 %v149, 125
        %v546 = vpop.permute.xlu0 %545
        %547 = vrot.lane.b32.xlu0 %v150, 125
        %v548 = vpop.permute.xlu0 %547
        %549 = vrot.lane.b32.xlu0 %v151, 125
        %v550 = vpop.permute.xlu0 %549
        %551 = vrot.lane.b32.xlu0 %v152, 125
        %v552 = vpop.permute.xlu0 %551
        %553 = vrot.lane.b32.xlu0 %v153, 125
        %v554 = vpop.permute.xlu0 %553
        %555 = vrot.lane.b32.xlu0 %v154, 125
        %v556 = vpop.permute.xlu0 %555
        %vm557 = vcmask 1022976
        %v558 = vsel %vm557, %v494, %v496
        %v559 = vsel %vm557, %v496, %v498
        %v560 = vsel %vm557, %v498, %v500
        %v561 = vsel %vm557, %v502, %v504
        %v562 = vsel %vm557, %v504, %v506
        %v563 = vsel %vm557, %v506, %v508
        %v564 = vsel %vm557, %v510, %v512
        %v565 = vsel %vm557, %v512, %v514
        %v566 = vsel %vm557, %v514, %v516
        %v567 = vsel %vm557, %v518, %v520
        %v568 = vsel %vm557, %v520, %v522
        %v569 = vsel %vm557, %v522, %v524
        %v570 = vsel %vm557, %v526, %v528
        %v571 = vsel %vm557, %v528, %v530
        %v572 = vsel %vm557, %v530, %v532
        %v573 = vsel %vm557, %v534, %v536
        %v574 = vsel %vm557, %v536, %v538
        %v575 = vsel %vm557, %v538, %v540
        %v576 = vsel %vm557, %v542, %v544
        %v577 = vsel %vm557, %v544, %v546
        %v578 = vsel %vm557, %v546, %v548
        %v579 = vsel %vm557, %v550, %v552
        %v580 = vsel %vm557, %v552, %v554
        %v581 = vsel %vm557, %v554, %v556
        %v614 = vadd.f32 %v461, %v558
        %v615 = vadd.f32 %v462, %v559
        %v616 = vadd.f32 %v463, %v560
        %v617 = vadd.f32 %v464, %v500
        %v618 = vadd.f32 %v465, %v561
        %v619 = vadd.f32 %v466, %v562
        %v620 = vadd.f32 %v467, %v563
        %v621 = vadd.f32 %v468, %v508
        %v622 = vadd.f32 %v469, %v564
        %v623 = vadd.f32 %v470, %v565
        %v624 = vadd.f32 %v471, %v566
        %v625 = vadd.f32 %v472, %v516
        %v626 = vadd.f32 %v473, %v567
        %v627 = vadd.f32 %v474, %v568
        %v628 = vadd.f32 %v475, %v569
        %v629 = vadd.f32 %v476, %v524
        %v630 = vadd.f32 %v477, %v570
        %v631 = vadd.f32 %v478, %v571
        %v632 = vadd.f32 %v479, %v572
        %v633 = vadd.f32 %v480, %v532
        %v634 = vadd.f32 %v481, %v573
        %v635 = vadd.f32 %v482, %v574
        %v636 = vadd.f32 %v483, %v575
        %v637 = vadd.f32 %v484, %v540
        %v638 = vadd.f32 %v485, %v576
        %v639 = vadd.f32 %v486, %v577
        %v640 = vadd.f32 %v487, %v578
        %v641 = vadd.f32 %v488, %v548
        %v642 = vadd.f32 %v489, %v579
        %v643 = vadd.f32 %v490, %v580
        %v644 = vadd.f32 %v491, %v581
        %v645 = vadd.f32 %v492, %v556
        %vm646 = vcmp.gt.f32.partialorder %v614, 0.0
        %vm647 = vcmp.gt.f32.partialorder %v615, 0.0
        %vm648 = vcmp.gt.f32.partialorder %v616, 0.0
        %vm649 = vcmp.gt.f32.partialorder %v617, 0.0
        %vm650 = vcmp.gt.f32.partialorder %v618, 0.0
        %vm651 = vcmp.gt.f32.partialorder %v619, 0.0
        %vm652 = vcmp.gt.f32.partialorder %v620, 0.0
        %vm653 = vcmp.gt.f32.partialorder %v621, 0.0
        %vm654 = vcmp.gt.f32.partialorder %v622, 0.0
        %vm655 = vcmp.gt.f32.partialorder %v623, 0.0
        %vm656 = vcmp.gt.f32.partialorder %v624, 0.0
        %vm657 = vcmp.gt.f32.partialorder %v625, 0.0
        %vm658 = vcmp.gt.f32.partialorder %v626, 0.0
        %vm659 = vcmp.gt.f32.partialorder %v627, 0.0
        %vm660 = vcmp.gt.f32.partialorder %v628, 0.0
        %vm661 = vcmp.gt.f32.partialorder %v629, 0.0
        %vm662 = vcmp.gt.f32.partialorder %v630, 0.0
        %vm663 = vcmp.gt.f32.partialorder %v631, 0.0
        %vm664 = vcmp.gt.f32.partialorder %v632, 0.0
        %vm665 = vcmp.gt.f32.partialorder %v633, 0.0
        %vm666 = vcmp.gt.f32.partialorder %v634, 0.0
        %vm667 = vcmp.gt.f32.partialorder %v635, 0.0
        %vm668 = vcmp.gt.f32.partialorder %v636, 0.0
        %vm669 = vcmp.gt.f32.partialorder %v637, 0.0
        %vm670 = vcmp.gt.f32.partialorder %v638, 0.0
        %vm671 = vcmp.gt.f32.partialorder %v639, 0.0
        %vm672 = vcmp.gt.f32.partialorder %v640, 0.0
        %vm673 = vcmp.gt.f32.partialorder %v641, 0.0
        %vm674 = vcmp.gt.f32.partialorder %v642, 0.0
        %vm675 = vcmp.gt.f32.partialorder %v643, 0.0
        %vm676 = vcmp.gt.f32.partialorder %v644, 0.0
        %vm677 = vcmp.gt.f32.partialorder %v645, 0.0
        %v678 = vsel %vm646, 1, 0
        %v679 = vsel %vm647, 1, 0
        %v680 = vsel %vm648, 1, 0
        %v681 = vsel %vm649, 1, 0
        %v682 = vsel %vm650, 1, 0
        %v683 = vsel %vm651, 1, 0
        %v684 = vsel %vm652, 1, 0
        %v685 = vsel %vm653, 1, 0
        %v686 = vsel %vm654, 1, 0
        %v687 = vsel %vm655, 1, 0
        %v688 = vsel %vm656, 1, 0
        %v689 = vsel %vm657, 1, 0
        %v690 = vsel %vm658, 1, 0
        %v691 = vsel %vm659, 1, 0
        %v692 = vsel %vm660, 1, 0
        %v693 = vsel %vm661, 1, 0
        %v694 = vsel %vm662, 1, 0
        %v695 = vsel %vm663, 1, 0
        %v696 = vsel %vm664, 1, 0
        %v697 = vsel %vm665, 1, 0
        %v698 = vsel %vm666, 1, 0
        %v699 = vsel %vm667, 1, 0
        %v700 = vsel %vm668, 1, 0
        %v701 = vsel %vm669, 1, 0
        %v702 = vsel %vm670, 1, 0
        %v703 = vsel %vm671, 1, 0
        %v704 = vsel %vm672, 1, 0
        %v705 = vsel %vm673, 1, 0
        %v706 = vsel %vm674, 1, 0
        %v707 = vsel %vm675, 1, 0
        %v708 = vsel %vm676, 1, 0
        %v709 = vsel %vm677, 1, 0
        %v710 = vcvt.s32.f32 %v678
        %v711 = vcvt.s32.f32 %v679
        %v712 = vcvt.s32.f32 %v680
        %v713 = vcvt.s32.f32 %v681
        %v714 = vcvt.s32.f32 %v682
        %v715 = vcvt.s32.f32 %v683
        %v716 = vcvt.s32.f32 %v684
        %v717 = vcvt.s32.f32 %v685
        %v718 = vcvt.s32.f32 %v686
        %v719 = vcvt.s32.f32 %v687
        %v720 = vcvt.s32.f32 %v688
        %v721 = vcvt.s32.f32 %v689
        %v722 = vcvt.s32.f32 %v690
        %v723 = vcvt.s32.f32 %v691
        %v724 = vcvt.s32.f32 %v692
        %v725 = vcvt.s32.f32 %v693
        %v726 = vcvt.s32.f32 %v694
        %v727 = vcvt.s32.f32 %v695
        %v728 = vcvt.s32.f32 %v696
        %v729 = vcvt.s32.f32 %v697
        %v730 = vcvt.s32.f32 %v698
        %v731 = vcvt.s32.f32 %v699
        %v732 = vcvt.s32.f32 %v700
        %v733 = vcvt.s32.f32 %v701
        %v734 = vcvt.s32.f32 %v702
        %v735 = vcvt.s32.f32 %v703
        %v736 = vcvt.s32.f32 %v704
        %v737 = vcvt.s32.f32 %v705
        %v738 = vcvt.s32.f32 %v706
        %v739 = vcvt.s32.f32 %v707
        %v740 = vcvt.s32.f32 %v708
        %v741 = vcvt.s32.f32 %v709
        %v742 = vpack.c.bf16 %v714, %v710
        %v743 = vpack.c.bf16 %v715, %v711
        %v744 = vpack.c.bf16 %v716, %v712
        %v745 = vpack.c.bf16 %v717, %v713
        %v746 = vpack.c.bf16 %v722, %v718
        %v747 = vpack.c.bf16 %v723, %v719
        %v748 = vpack.c.bf16 %v724, %v720
        %v749 = vpack.c.bf16 %v725, %v721
        %v750 = vpack.c.bf16 %v730, %v726
        %v751 = vpack.c.bf16 %v731, %v727
        %v752 = vpack.c.bf16 %v732, %v728
        %v753 = vpack.c.bf16 %v733, %v729
        %v754 = vpack.c.bf16 %v738, %v734
        %v755 = vpack.c.bf16 %v739, %v735
        %v756 = vpack.c.bf16 %v740, %v736
        %v757 = vpack.c.bf16 %v741, %v737
        %v758 = vlaneseq
        %v759 = vshrl.u32 %v758, 7
        %v760 = vadd.s32 %v759, 8
        %v761 = vadd.s32 %v759, 16
        %v762 = vadd.s32 %v759, 24
        %v763 = vadd.s32 %v759, 32
        %v764 = vadd.s32 %v759, 40
        %v765 = vadd.s32 %v759, 48
        %v766 = vadd.s32 %v759, 56
        %v767 = vadd.s32 %v759, 64
        %v768 = vadd.s32 %v759, 72
        %v769 = vadd.s32 %v759, 80
        %v770 = vadd.s32 %v759, 88
        %v771 = vadd.s32 %v759, 96
        %v772 = vadd.s32 %v759, 104
        %v773 = vadd.s32 %v759, 112
        %v774 = vadd.s32 %v759, 120
        %v775 = vadd.s32 %v759, 128
        %v776 = vadd.s32 %v759, 136
        %v777 = vadd.s32 %v759, 144
        %v778 = vadd.s32 %v759, 152
        %v779 = vadd.s32 %v759, 160
        %v780 = vadd.s32 %v759, 168
        %v781 = vadd.s32 %v759, 176
        %v782 = vadd.s32 %v759, 184
        %v783 = vadd.s32 %v759, 192
        %v784 = vadd.s32 %v759, 200
        %v785 = vadd.s32 %v759, 208
        %v786 = vadd.s32 %v759, 216
        %v787 = vadd.s32 %v759, 224
        %v788 = vadd.s32 %v759, 232
        %v789 = vadd.s32 %v759, 240
        %v790 = vadd.s32 %v759, 248
        %v791 = vadd.s32 %v759, 256
        %v792 = vadd.s32 %v759, 264
        %v793 = vadd.s32 %v759, 272
        %v794 = vadd.s32 %v759, 280
        %v795 = vadd.s32 %v759, 288
        %v796 = vadd.s32 %v759, 296
        %v797 = vadd.s32 %v759, 304
        %v798 = vadd.s32 %v759, 312
        %v799 = vadd.s32 %v759, 320
        %v800 = vadd.s32 %v759, 328
        %v801 = vadd.s32 %v759, 336
        %v802 = vadd.s32 %v759, 344
        %v803 = vadd.s32 %v759, 352
        %v804 = vadd.s32 %v759, 360
        %v805 = vadd.s32 %v759, 368
        %v806 = vadd.s32 %v759, 376
        %v807 = vadd.s32 %v759, 384
        %v808 = vadd.s32 %v759, 392
        %v809 = vadd.s32 %v759, 400
        %v810 = vadd.s32 %v759, 408
        %v811 = vadd.s32 %v759, 416
        %v812 = vadd.s32 %v759, 424
        %v813 = vadd.s32 %v759, 432
        %v814 = vadd.s32 %v759, 440
        %v815 = vadd.s32 %v759, 448
        %v816 = vadd.s32 %v759, 456
        %v817 = vadd.s32 %v759, 464
        %v818 = vadd.s32 %v759, 472
        %v819 = vadd.s32 %v759, 480
        %v820 = vadd.s32 %v759, 488
        %v821 = vadd.s32 %v759, 496
        %v822 = vadd.s32 %v759, 504
        %v823 = vlaneseq
        %v824 = vand.u32 %v823, 127
        %v825 = vmul.u32 %v824, 4
        %vm826 = vcmp.eq.s32.totalorder %v759, %v825
        %vm827 = vcmp.eq.s32.totalorder %v760, %v825
        %vm828 = vcmp.eq.s32.totalorder %v761, %v825
        %vm829 = vcmp.eq.s32.totalorder %v762, %v825
        %vm830 = vcmp.eq.s32.totalorder %v763, %v825
        %vm831 = vcmp.eq.s32.totalorder %v764, %v825
        %vm832 = vcmp.eq.s32.totalorder %v765, %v825
        %vm833 = vcmp.eq.s32.totalorder %v766, %v825
        %vm834 = vcmp.eq.s32.totalorder %v767, %v825
        %vm835 = vcmp.eq.s32.totalorder %v768, %v825
        %vm836 = vcmp.eq.s32.totalorder %v769, %v825
        %vm837 = vcmp.eq.s32.totalorder %v770, %v825
        %vm838 = vcmp.eq.s32.totalorder %v771, %v825
        %vm839 = vcmp.eq.s32.totalorder %v772, %v825
        %vm840 = vcmp.eq.s32.totalorder %v773, %v825
        %vm841 = vcmp.eq.s32.totalorder %v774, %v825
        %vm842 = vcmp.eq.s32.totalorder %v775, %v825
        %vm843 = vcmp.eq.s32.totalorder %v776, %v825
        %vm844 = vcmp.eq.s32.totalorder %v777, %v825
        %vm845 = vcmp.eq.s32.totalorder %v778, %v825
        %vm846 = vcmp.eq.s32.totalorder %v779, %v825
        %vm847 = vcmp.eq.s32.totalorder %v780, %v825
        %vm848 = vcmp.eq.s32.totalorder %v781, %v825
        %vm849 = vcmp.eq.s32.totalorder %v782, %v825
        %vm850 = vcmp.eq.s32.totalorder %v783, %v825
        %vm851 = vcmp.eq.s32.totalorder %v784, %v825
        %vm852 = vcmp.eq.s32.totalorder %v785, %v825
        %vm853 = vcmp.eq.s32.totalorder %v786, %v825
        %vm854 = vcmp.eq.s32.totalorder %v787, %v825
        %vm855 = vcmp.eq.s32.totalorder %v788, %v825
        %vm856 = vcmp.eq.s32.totalorder %v789, %v825
        %vm857 = vcmp.eq.s32.totalorder %v790, %v825
        %vm858 = vcmp.eq.s32.totalorder %v791, %v825
        %vm859 = vcmp.eq.s32.totalorder %v792, %v825
        %vm860 = vcmp.eq.s32.totalorder %v793, %v825
        %vm861 = vcmp.eq.s32.totalorder %v794, %v825
        %vm862 = vcmp.eq.s32.totalorder %v795, %v825
        %vm863 = vcmp.eq.s32.totalorder %v796, %v825
        %vm864 = vcmp.eq.s32.totalorder %v797, %v825
        %vm865 = vcmp.eq.s32.totalorder %v798, %v825
        %vm866 = vcmp.eq.s32.totalorder %v799, %v825
        %vm867 = vcmp.eq.s32.totalorder %v800, %v825
        %vm868 = vcmp.eq.s32.totalorder %v801, %v825
        %vm869 = vcmp.eq.s32.totalorder %v802, %v825
        %vm870 = vcmp.eq.s32.totalorder %v803, %v825
        %vm871 = vcmp.eq.s32.totalorder %v804, %v825
        %vm872 = vcmp.eq.s32.totalorder %v805, %v825
        %vm873 = vcmp.eq.s32.totalorder %v806, %v825
        %vm874 = vcmp.eq.s32.totalorder %v807, %v825
        %vm875 = vcmp.eq.s32.totalorder %v808, %v825
        %vm876 = vcmp.eq.s32.totalorder %v809, %v825
        %vm877 = vcmp.eq.s32.totalorder %v810, %v825
        %vm878 = vcmp.eq.s32.totalorder %v811, %v825
        %vm879 = vcmp.eq.s32.totalorder %v812, %v825
        %vm880 = vcmp.eq.s32.totalorder %v813, %v825
        %vm881 = vcmp.eq.s32.totalorder %v814, %v825
        %vm882 = vcmp.eq.s32.totalorder %v815, %v825
        %vm883 = vcmp.eq.s32.totalorder %v816, %v825
        %vm884 = vcmp.eq.s32.totalorder %v817, %v825
        %vm885 = vcmp.eq.s32.totalorder %v818, %v825
        %vm886 = vcmp.eq.s32.totalorder %v819, %v825
        %vm887 = vcmp.eq.s32.totalorder %v820, %v825
        %vm888 = vcmp.eq.s32.totalorder %v821, %v825
        %vm889 = vcmp.eq.s32.totalorder %v822, %v825
        %v890 = vsel %vm826, 1, 0
        %v891 = vsel %vm827, 1, 0
        %v892 = vsel %vm828, 1, 0
        %v893 = vsel %vm829, 1, 0
        %v894 = vsel %vm830, 1, 0
        %v895 = vsel %vm831, 1, 0
        %v896 = vsel %vm832, 1, 0
        %v897 = vsel %vm833, 1, 0
        %v898 = vsel %vm834, 1, 0
        %v899 = vsel %vm835, 1, 0
        %v900 = vsel %vm836, 1, 0
        %v901 = vsel %vm837, 1, 0
        %v902 = vsel %vm838, 1, 0
        %v903 = vsel %vm839, 1, 0
        %v904 = vsel %vm840, 1, 0
        %v905 = vsel %vm841, 1, 0
        %v906 = vsel %vm842, 1, 0
        %v907 = vsel %vm843, 1, 0
        %v908 = vsel %vm844, 1, 0
        %v909 = vsel %vm845, 1, 0
        %v910 = vsel %vm846, 1, 0
        %v911 = vsel %vm847, 1, 0
        %v912 = vsel %vm848, 1, 0
        %v913 = vsel %vm849, 1, 0
        %v914 = vsel %vm850, 1, 0
        %v915 = vsel %vm851, 1, 0
        %v916 = vsel %vm852, 1, 0
        %v917 = vsel %vm853, 1, 0
        %v918 = vsel %vm854, 1, 0
        %v919 = vsel %vm855, 1, 0
        %v920 = vsel %vm856, 1, 0
        %v921 = vsel %vm857, 1, 0
        %v922 = vsel %vm858, 1, 0
        %v923 = vsel %vm859, 1, 0
        %v924 = vsel %vm860, 1, 0
        %v925 = vsel %vm861, 1, 0
        %v926 = vsel %vm862, 1, 0
        %v927 = vsel %vm863, 1, 0
        %v928 = vsel %vm864, 1, 0
        %v929 = vsel %vm865, 1, 0
        %v930 = vsel %vm866, 1, 0
        %v931 = vsel %vm867, 1, 0
        %v932 = vsel %vm868, 1, 0
        %v933 = vsel %vm869, 1, 0
        %v934 = vsel %vm870, 1, 0
        %v935 = vsel %vm871, 1, 0
        %v936 = vsel %vm872, 1, 0
        %v937 = vsel %vm873, 1, 0
        %v938 = vsel %vm874, 1, 0
        %v939 = vsel %vm875, 1, 0
        %v940 = vsel %vm876, 1, 0
        %v941 = vsel %vm877, 1, 0
        %v942 = vsel %vm878, 1, 0
        %v943 = vsel %vm879, 1, 0
        %v944 = vsel %vm880, 1, 0
        %v945 = vsel %vm881, 1, 0
        %v946 = vsel %vm882, 1, 0
        %v947 = vsel %vm883, 1, 0
        %v948 = vsel %vm884, 1, 0
        %v949 = vsel %vm885, 1, 0
        %v950 = vsel %vm886, 1, 0
        %v951 = vsel %vm887, 1, 0
        %v952 = vsel %vm888, 1, 0
        %v953 = vsel %vm889, 1, 0
        %v954 = vcvt.s32.f32 %v890
        %v955 = vcvt.s32.f32 %v891
        %v956 = vcvt.s32.f32 %v892
        %v957 = vcvt.s32.f32 %v893
        %v958 = vcvt.s32.f32 %v894
        %v959 = vcvt.s32.f32 %v895
        %v960 = vcvt.s32.f32 %v896
        %v961 = vcvt.s32.f32 %v897
        %v962 = vcvt.s32.f32 %v898
        %v963 = vcvt.s32.f32 %v899
        %v964 = vcvt.s32.f32 %v900
        %v965 = vcvt.s32.f32 %v901
        %v966 = vcvt.s32.f32 %v902
        %v967 = vcvt.s32.f32 %v903
        %v968 = vcvt.s32.f32 %v904
        %v969 = vcvt.s32.f32 %v905
        %v970 = vcvt.s32.f32 %v906
        %v971 = vcvt.s32.f32 %v907
        %v972 = vcvt.s32.f32 %v908
        %v973 = vcvt.s32.f32 %v909
        %v974 = vcvt.s32.f32 %v910
        %v975 = vcvt.s32.f32 %v911
        %v976 = vcvt.s32.f32 %v912
        %v977 = vcvt.s32.f32 %v913
        %v978 = vcvt.s32.f32 %v914
        %v979 = vcvt.s32.f32 %v915
        %v980 = vcvt.s32.f32 %v916
        %v981 = vcvt.s32.f32 %v917
        %v982 = vcvt.s32.f32 %v918
        %v983 = vcvt.s32.f32 %v919
        %v984 = vcvt.s32.f32 %v920
        %v985 = vcvt.s32.f32 %v921
        %v986 = vcvt.s32.f32 %v922
        %v987 = vcvt.s32.f32 %v923
        %v988 = vcvt.s32.f32 %v924
        %v989 = vcvt.s32.f32 %v925
        %v990 = vcvt.s32.f32 %v926
        %v991 = vcvt.s32.f32 %v927
        %v992 = vcvt.s32.f32 %v928
        %v993 = vcvt.s32.f32 %v929
        %v994 = vcvt.s32.f32 %v930
        %v995 = vcvt.s32.f32 %v931
        %v996 = vcvt.s32.f32 %v932
        %v997 = vcvt.s32.f32 %v933
        %v998 = vcvt.s32.f32 %v934
        %v999 = vcvt.s32.f32 %v935
        %v1000 = vcvt.s32.f32 %v936
        %v1001 = vcvt.s32.f32 %v937
        %v1002 = vcvt.s32.f32 %v938
        %v1003 = vcvt.s32.f32 %v939
        %v1004 = vcvt.s32.f32 %v940
        %v1005 = vcvt.s32.f32 %v941
        %v1006 = vcvt.s32.f32 %v942
        %v1007 = vcvt.s32.f32 %v943
        %v1008 = vcvt.s32.f32 %v944
        %v1009 = vcvt.s32.f32 %v945
        %v1010 = vcvt.s32.f32 %v946
        %v1011 = vcvt.s32.f32 %v947
        %v1012 = vcvt.s32.f32 %v948
        %v1013 = vcvt.s32.f32 %v949
        %v1014 = vcvt.s32.f32 %v950
        %v1015 = vcvt.s32.f32 %v951
        %v1016 = vcvt.s32.f32 %v952
        %v1017 = vcvt.s32.f32 %v953
        %v1018 = vpack.c.bf16 %v955, %v954
        %v1019 = vpack.c.bf16 %v957, %v956
        %v1020 = vpack.c.bf16 %v959, %v958
        %v1021 = vpack.c.bf16 %v961, %v960
        %v1022 = vpack.c.bf16 %v963, %v962
        %v1023 = vpack.c.bf16 %v965, %v964
        %v1024 = vpack.c.bf16 %v967, %v966
        %v1025 = vpack.c.bf16 %v969, %v968
        %v1026 = vpack.c.bf16 %v971, %v970
        %v1027 = vpack.c.bf16 %v973, %v972
        %v1028 = vpack.c.bf16 %v975, %v974
        %v1029 = vpack.c.bf16 %v977, %v976
        %v1030 = vpack.c.bf16 %v979, %v978
        %v1031 = vpack.c.bf16 %v981, %v980
        %v1032 = vpack.c.bf16 %v983, %v982
        %v1033 = vpack.c.bf16 %v985, %v984
        %v1034 = vpack.c.bf16 %v987, %v986
        %v1035 = vpack.c.bf16 %v989, %v988
        %v1036 = vpack.c.bf16 %v991, %v990
        %v1037 = vpack.c.bf16 %v993, %v992
        %v1038 = vpack.c.bf16 %v995, %v994
        %v1039 = vpack.c.bf16 %v997, %v996
        %v1040 = vpack.c.bf16 %v999, %v998
        %v1041 = vpack.c.bf16 %v1001, %v1000
        %v1042 = vpack.c.bf16 %v1003, %v1002
        %v1043 = vpack.c.bf16 %v1005, %v1004
        %v1044 = vpack.c.bf16 %v1007, %v1006
        %v1045 = vpack.c.bf16 %v1009, %v1008
        %v1046 = vpack.c.bf16 %v1011, %v1010
        %v1047 = vpack.c.bf16 %v1013, %v1012
        %v1048 = vpack.c.bf16 %v1015, %v1014
        %v1049 = vpack.c.bf16 %v1017, %v1016
        %v1051 = vsel %vm557, %v745, 0
        %v1054 = vsel %vm557, %v749, 0
        %v1057 = vsel %vm557, %v753, 0
        %v1060 = vsel %vm557, %v757, 0
        %vm1062 = vcmask 1045504
        %vm1063 = vcmask 1046528
        %v1064 = vsel %vm1062, 4294967295, 65535
        %v1065 = vsel %vm1063, %v1064, 0
        %v1067 = vand.u32 %v1049, %v1065
        %1069 = vmatpush.bf16.msra.mxu0 %v1025
        %1070 = vmatpush.bf16.msra.mxu0 %v1024
        %1071 = vmatpush.bf16.msra.mxu0 %v1023
        %1072 = vmatpush.bf16.msra.mxu0 %v1022
        %1073 = vmatpush.bf16.msra.mxu0 %v1021
        %1074 = vmatpush.bf16.msra.mxu0 %v1020
        %1075 = vmatpush.bf16.msra.mxu0 %v1019
        %1076 = vmatpush.bf16.msra.mxu0 %v1018
        %1077 = vmatmul.bf16.gmra.mxu0 %v742
        %v1078 = vpop.f32.mrf.mxu0
        %v1079 = vadd.f32 0.0, %v1078
        %v1080 = vpop.f32.mrf.mxu0
        %v1081 = vadd.f32 0.0, %v1080
        %1082 = vmatmul.bf16.gmra.mxu0 %v746
        %v1083 = vpop.f32.mrf.mxu0
        %v1084 = vadd.f32 0.0, %v1083
        %v1085 = vpop.f32.mrf.mxu0
        %v1086 = vadd.f32 0.0, %v1085
        %1087 = vmatmul.bf16.gmra.mxu0 %v750
        %v1088 = vpop.f32.mrf.mxu0
        %v1089 = vadd.f32 0.0, %v1088
        %v1090 = vpop.f32.mrf.mxu0
        %v1091 = vadd.f32 0.0, %v1090
        %1092 = vmatmul.bf16.gmra.mxu0 %v754
        %v1093 = vpop.f32.mrf.mxu0
        %v1094 = vadd.f32 0.0, %v1093
        %v1095 = vpop.f32.mrf.mxu0
        %v1096 = vadd.f32 0.0, %v1095
        %1097 = vdwg.mxu0
        %1098 = vmatpush.bf16.msra.mxu0 %v1033
        %1099 = vmatpush.bf16.msra.mxu0 %v1032
        %1100 = vmatpush.bf16.msra.mxu0 %v1031
        %1101 = vmatpush.bf16.msra.mxu0 %v1030
        %1102 = vmatpush.bf16.msra.mxu0 %v1029
        %1103 = vmatpush.bf16.msra.mxu0 %v1028
        %1104 = vmatpush.bf16.msra.mxu0 %v1027
        %1105 = vmatpush.bf16.msra.mxu0 %v1026
        %1106 = vmatmul.bf16.gmra.mxu0 %v743
        %v1107 = vpop.f32.mrf.mxu0
        %v1108 = vadd.f32 %v1079, %v1107
        %v1109 = vpop.f32.mrf.mxu0
        %v1110 = vadd.f32 %v1081, %v1109
        %1111 = vmatmul.bf16.gmra.mxu0 %v747
        %v1112 = vpop.f32.mrf.mxu0
        %v1113 = vadd.f32 %v1084, %v1112
        %v1114 = vpop.f32.mrf.mxu0
        %v1115 = vadd.f32 %v1086, %v1114
        %1116 = vmatmul.bf16.gmra.mxu0 %v751
        %v1117 = vpop.f32.mrf.mxu0
        %v1118 = vadd.f32 %v1089, %v1117
        %v1119 = vpop.f32.mrf.mxu0
        %v1120 = vadd.f32 %v1091, %v1119
        %1121 = vmatmul.bf16.gmra.mxu0 %v755
        %v1122 = vpop.f32.mrf.mxu0
        %v1123 = vadd.f32 %v1094, %v1122
        %v1124 = vpop.f32.mrf.mxu0
        %v1125 = vadd.f32 %v1096, %v1124
        %1126 = vdwg.mxu0
        %1127 = vmatpush.bf16.msra.mxu0 %v1041
        %1128 = vmatpush.bf16.msra.mxu0 %v1040
        %1129 = vmatpush.bf16.msra.mxu0 %v1039
        %1130 = vmatpush.bf16.msra.mxu0 %v1038
        %1131 = vmatpush.bf16.msra.mxu0 %v1037
        %1132 = vmatpush.bf16.msra.mxu0 %v1036
        %1133 = vmatpush.bf16.msra.mxu0 %v1035
        %1134 = vmatpush.bf16.msra.mxu0 %v1034
        %1135 = vmatmul.bf16.gmra.mxu0 %v744
        %v1136 = vpop.f32.mrf.mxu0
        %v1137 = vadd.f32 %v1108, %v1136
        %v1138 = vpop.f32.mrf.mxu0
        %v1139 = vadd.f32 %v1110, %v1138
        %1140 = vmatmul.bf16.gmra.mxu0 %v748
        %v1141 = vpop.f32.mrf.mxu0
        %v1142 = vadd.f32 %v1113, %v1141
        %v1143 = vpop.f32.mrf.mxu0
        %v1144 = vadd.f32 %v1115, %v1143
        %1145 = vmatmul.bf16.gmra.mxu0 %v752
        %v1146 = vpop.f32.mrf.mxu0
        %v1147 = vadd.f32 %v1118, %v1146
        %v1148 = vpop.f32.mrf.mxu0
        %v1149 = vadd.f32 %v1120, %v1148
        %1150 = vmatmul.bf16.gmra.mxu0 %v756
        %v1151 = vpop.f32.mrf.mxu0
        %v1152 = vadd.f32 %v1123, %v1151
        %v1153 = vpop.f32.mrf.mxu0
        %v1154 = vadd.f32 %v1125, %v1153
        %1155 = vdwg.mxu0
        %1156 = vmatpush.bf16.msra.mxu0 %v1067
        %1157 = vmatpush.bf16.msra.mxu0 %v1048
        %1158 = vmatpush.bf16.msra.mxu0 %v1047
        %1159 = vmatpush.bf16.msra.mxu0 %v1046
        %1160 = vmatpush.bf16.msra.mxu0 %v1045
        %1161 = vmatpush.bf16.msra.mxu0 %v1044
        %1162 = vmatpush.bf16.msra.mxu0 %v1043
        %1163 = vmatpush.bf16.msra.mxu0 %v1042
        %1164 = vmatmul.bf16.gmra.mxu0 %v1051
        %v1165 = vpop.f32.mrf.mxu0
        %v1166 = vadd.f32 %v1137, %v1165
        %v1167 = vpop.f32.mrf.mxu0
        %v1168 = vadd.f32 %v1139, %v1167
        %1169 = vmatmul.bf16.gmra.mxu0 %v1054
        %v1170 = vpop.f32.mrf.mxu0
        %v1171 = vadd.f32 %v1142, %v1170
        %v1172 = vpop.f32.mrf.mxu0
        %v1173 = vadd.f32 %v1144, %v1172
        %1174 = vmatmul.bf16.gmra.mxu0 %v1057
        %v1175 = vpop.f32.mrf.mxu0
        %v1176 = vadd.f32 %v1147, %v1175
        %v1177 = vpop.f32.mrf.mxu0
        %v1178 = vadd.f32 %v1149, %v1177
        %1179 = vmatmul.bf16.gmra.mxu0 %v1060
        %v1180 = vpop.f32.mrf.mxu0
        %v1181 = vadd.f32 %v1152, %v1180
        %v1182 = vpop.f32.mrf.mxu0
        %v1183 = vadd.f32 %v1154, %v1182
        %1184 = vdwg.mxu0
        %vm1185 = vcmp.gt.f32.partialorder %v1166, 0.0
        %vm1186 = vcmp.gt.f32.partialorder %v1168, 0.0
        %vm1187 = vcmp.gt.f32.partialorder %v1171, 0.0
        %vm1188 = vcmp.gt.f32.partialorder %v1173, 0.0
        %vm1189 = vcmp.gt.f32.partialorder %v1176, 0.0
        %vm1190 = vcmp.gt.f32.partialorder %v1178, 0.0
        %vm1191 = vcmp.gt.f32.partialorder %v1181, 0.0
        %vm1192 = vcmp.gt.f32.partialorder %v1183, 0.0
        %vm1193 = vmpackc.low %vm1186, %vm1185
        %vm1194 = vmpackc.low %vm1188, %vm1187
        %v1195 = vsel %vm1193, 16711935, 0
        %v1196 = vsel %vm1194, 16711935, 0
        %v1197 = vpack.c.b8 %v1196, %v1195
        %vm1198 = vnez %v1197
        %vm1199 = vmpackc.low %vm1190, %vm1189
        %vm1200 = vmpackc.low %vm1192, %vm1191
        %v1201 = vsel %vm1199, 16711935, 0
        %v1202 = vsel %vm1200, 16711935, 0
        %v1203 = vpack.c.b8 %v1202, %v1201
        %vm1204 = vnez %v1203
        %v1205 = vsel %vm1198, 16843009, 0
        %v1206 = vsel %vm1204, 16843009, 0
        %1207 = vst [vmem:[%s112] sm:$0xff] %v1205
        %1208 = vst [vmem:[%s112 + $0x10] sm:$0xff] %v1206
        %v1209 = vld [vmem:[%s118 + $0x20] sm:$0xff]
        %v1210 = vld [vmem:[%s118 + $0x28] sm:$0xff]
        %v1211 = vld [vmem:[%s118 + $0x30] sm:$0xff]
        %v1212 = vld [vmem:[%s118 + $0x38] sm:$0xff]
        %v1213 = vld [vmem:[%s118 + $0x60] sm:$0xff]
        %v1214 = vld [vmem:[%s118 + $0x68] sm:$0xff]
        %v1215 = vld [vmem:[%s118 + $0x70] sm:$0xff]
        %v1216 = vld [vmem:[%s118 + $0x78] sm:$0xff]
        %v1217 = vld [vmem:[%s118 + $0xa0] sm:$0xff]
        %v1218 = vld [vmem:[%s118 + $0xa8] sm:$0xff]
        %v1219 = vld [vmem:[%s118 + $0xb0] sm:$0xff]
        %v1220 = vld [vmem:[%s118 + $0xb8] sm:$0xff]
        %v1221 = vld [vmem:[%s118 + $0xe0] sm:$0xff]
        %v1222 = vld [vmem:[%s118 + $0xe8] sm:$0xff]
        %v1223 = vld [vmem:[%s118 + $0xf0] sm:$0xff]
        %v1224 = vld [vmem:[%s118 + $0xf8] sm:$0xff]
        %v1225 = vld [vmem:[%s118 + $0x120] sm:$0xff]
        %v1226 = vld [vmem:[%s118 + $0x128] sm:$0xff]
        %v1227 = vld [vmem:[%s118 + $0x130] sm:$0xff]
        %v1228 = vld [vmem:[%s118 + $0x138] sm:$0xff]
        %v1229 = vld [vmem:[%s118 + $0x160] sm:$0xff]
        %v1230 = vld [vmem:[%s118 + $0x168] sm:$0xff]
        %v1231 = vld [vmem:[%s118 + $0x170] sm:$0xff]
        %v1232 = vld [vmem:[%s118 + $0x178] sm:$0xff]
        %v1233 = vld [vmem:[%s118 + $0x1a0] sm:$0xff]
        %v1234 = vld [vmem:[%s118 + $0x1a8] sm:$0xff]
        %v1235 = vld [vmem:[%s118 + $0x1b0] sm:$0xff]
        %v1236 = vld [vmem:[%s118 + $0x1b8] sm:$0xff]
        %v1237 = vld [vmem:[%s118 + $0x1e0] sm:$0xff]
        %v1238 = vld [vmem:[%s118 + $0x1e8] sm:$0xff]
        %v1239 = vld [vmem:[%s118 + $0x1f0] sm:$0xff]
        %v1240 = vld [vmem:[%s118 + $0x1f8] sm:$0xff]
        %1273 = vrot.lane.b32.xlu0 %v1209, 127
        %v1274 = vpop.permute.xlu0 %1273
        %1275 = vrot.lane.b32.xlu0 %v1210, 127
        %v1276 = vpop.permute.xlu0 %1275
        %1277 = vrot.lane.b32.xlu0 %v1211, 127
        %v1278 = vpop.permute.xlu0 %1277
        %1279 = vrot.lane.b32.xlu0 %v1212, 127
        %v1280 = vpop.permute.xlu0 %1279
        %1281 = vrot.lane.b32.xlu0 %v1213, 127
        %v1282 = vpop.permute.xlu0 %1281
        %1283 = vrot.lane.b32.xlu0 %v1214, 127
        %v1284 = vpop.permute.xlu0 %1283
        %1285 = vrot.lane.b32.xlu0 %v1215, 127
        %v1286 = vpop.permute.xlu0 %1285
        %1287 = vrot.lane.b32.xlu0 %v1216, 127
        %v1288 = vpop.permute.xlu0 %1287
        %1289 = vrot.lane.b32.xlu0 %v1217, 127
        %v1290 = vpop.permute.xlu0 %1289
        %1291 = vrot.lane.b32.xlu0 %v1218, 127
        %v1292 = vpop.permute.xlu0 %1291
        %1293 = vrot.lane.b32.xlu0 %v1219, 127
        %v1294 = vpop.permute.xlu0 %1293
        %1295 = vrot.lane.b32.xlu0 %v1220, 127
        %v1296 = vpop.permute.xlu0 %1295
        %1297 = vrot.lane.b32.xlu0 %v1221, 127
        %v1298 = vpop.permute.xlu0 %1297
        %1299 = vrot.lane.b32.xlu0 %v1222, 127
        %v1300 = vpop.permute.xlu0 %1299
        %1301 = vrot.lane.b32.xlu0 %v1223, 127
        %v1302 = vpop.permute.xlu0 %1301
        %1303 = vrot.lane.b32.xlu0 %v1224, 127
        %v1304 = vpop.permute.xlu0 %1303
        %1305 = vrot.lane.b32.xlu0 %v1225, 127
        %v1306 = vpop.permute.xlu0 %1305
        %1307 = vrot.lane.b32.xlu0 %v1226, 127
        %v1308 = vpop.permute.xlu0 %1307
        %1309 = vrot.lane.b32.xlu0 %v1227, 127
        %v1310 = vpop.permute.xlu0 %1309
        %1311 = vrot.lane.b32.xlu0 %v1228, 127
        %v1312 = vpop.permute.xlu0 %1311
        %1313 = vrot.lane.b32.xlu0 %v1229, 127
        %v1314 = vpop.permute.xlu0 %1313
        %1315 = vrot.lane.b32.xlu0 %v1230, 127
        %v1316 = vpop.permute.xlu0 %1315
        %1317 = vrot.lane.b32.xlu0 %v1231, 127
        %v1318 = vpop.permute.xlu0 %1317
        %1319 = vrot.lane.b32.xlu0 %v1232, 127
        %v1320 = vpop.permute.xlu0 %1319
        %1321 = vrot.lane.b32.xlu0 %v1233, 127
        %v1322 = vpop.permute.xlu0 %1321
        %1323 = vrot.lane.b32.xlu0 %v1234, 127
        %v1324 = vpop.permute.xlu0 %1323
        %1325 = vrot.lane.b32.xlu0 %v1235, 127
        %v1326 = vpop.permute.xlu0 %1325
        %1327 = vrot.lane.b32.xlu0 %v1236, 127
        %v1328 = vpop.permute.xlu0 %1327
        %1329 = vrot.lane.b32.xlu0 %v1237, 127
        %v1330 = vpop.permute.xlu0 %1329
        %1331 = vrot.lane.b32.xlu0 %v1238, 127
        %v1332 = vpop.permute.xlu0 %1331
        %1333 = vrot.lane.b32.xlu0 %v1239, 127
        %v1334 = vpop.permute.xlu0 %1333
        %1335 = vrot.lane.b32.xlu0 %v1240, 127
        %v1336 = vpop.permute.xlu0 %1335
        %v1337 = vsel %vm251, %v1274, %v1276
        %v1338 = vsel %vm251, %v1276, %v1278
        %v1339 = vsel %vm251, %v1278, %v1280
        %v1340 = vsel %vm251, %v1282, %v1284
        %v1341 = vsel %vm251, %v1284, %v1286
        %v1342 = vsel %vm251, %v1286, %v1288
        %v1343 = vsel %vm251, %v1290, %v1292
        %v1344 = vsel %vm251, %v1292, %v1294
        %v1345 = vsel %vm251, %v1294, %v1296
        %v1346 = vsel %vm251, %v1298, %v1300
        %v1347 = vsel %vm251, %v1300, %v1302
        %v1348 = vsel %vm251, %v1302, %v1304
        %v1349 = vsel %vm251, %v1306, %v1308
        %v1350 = vsel %vm251, %v1308, %v1310
        %v1351 = vsel %vm251, %v1310, %v1312
        %v1352 = vsel %vm251, %v1314, %v1316
        %v1353 = vsel %vm251, %v1316, %v1318
        %v1354 = vsel %vm251, %v1318, %v1320
        %v1355 = vsel %vm251, %v1322, %v1324
        %v1356 = vsel %vm251, %v1324, %v1326
        %v1357 = vsel %vm251, %v1326, %v1328
        %v1358 = vsel %vm251, %v1330, %v1332
        %v1359 = vsel %vm251, %v1332, %v1334
        %v1360 = vsel %vm251, %v1334, %v1336
        %v1393 = vadd.f32 %v1209, %v1337
        %v1394 = vadd.f32 %v1210, %v1338
        %v1395 = vadd.f32 %v1211, %v1339
        %v1396 = vadd.f32 %v1212, %v1280
        %v1397 = vadd.f32 %v1213, %v1340
        %v1398 = vadd.f32 %v1214, %v1341
        %v1399 = vadd.f32 %v1215, %v1342
        %v1400 = vadd.f32 %v1216, %v1288
        %v1401 = vadd.f32 %v1217, %v1343
        %v1402 = vadd.f32 %v1218, %v1344
        %v1403 = vadd.f32 %v1219, %v1345
        %v1404 = vadd.f32 %v1220, %v1296
        %v1405 = vadd.f32 %v1221, %v1346
        %v1406 = vadd.f32 %v1222, %v1347
        %v1407 = vadd.f32 %v1223, %v1348
        %v1408 = vadd.f32 %v1224, %v1304
        %v1409 = vadd.f32 %v1225, %v1349
        %v1410 = vadd.f32 %v1226, %v1350
        %v1411 = vadd.f32 %v1227, %v1351
        %v1412 = vadd.f32 %v1228, %v1312
        %v1413 = vadd.f32 %v1229, %v1352
        %v1414 = vadd.f32 %v1230, %v1353
        %v1415 = vadd.f32 %v1231, %v1354
        %v1416 = vadd.f32 %v1232, %v1320
        %v1417 = vadd.f32 %v1233, %v1355
        %v1418 = vadd.f32 %v1234, %v1356
        %v1419 = vadd.f32 %v1235, %v1357
        %v1420 = vadd.f32 %v1236, %v1328
        %v1421 = vadd.f32 %v1237, %v1358
        %v1422 = vadd.f32 %v1238, %v1359
        %v1423 = vadd.f32 %v1239, %v1360
        %v1424 = vadd.f32 %v1240, %v1336
        %1425 = vrot.lane.b32.xlu0 %v1209, 126
        %v1426 = vpop.permute.xlu0 %1425
        %1427 = vrot.lane.b32.xlu0 %v1210, 126
        %v1428 = vpop.permute.xlu0 %1427
        %1429 = vrot.lane.b32.xlu0 %v1211, 126
        %v1430 = vpop.permute.xlu0 %1429
        %1431 = vrot.lane.b32.xlu0 %v1212, 126
        %v1432 = vpop.permute.xlu0 %1431
        %1433 = vrot.lane.b32.xlu0 %v1213, 126
        %v1434 = vpop.permute.xlu0 %1433
        %1435 = vrot.lane.b32.xlu0 %v1214, 126
        %v1436 = vpop.permute.xlu0 %1435
        %1437 = vrot.lane.b32.xlu0 %v1215, 126
        %v1438 = vpop.permute.xlu0 %1437
        %1439 = vrot.lane.b32.xlu0 %v1216, 126
        %v1440 = vpop.permute.xlu0 %1439
        %1441 = vrot.lane.b32.xlu0 %v1217, 126
        %v1442 = vpop.permute.xlu0 %1441
        %1443 = vrot.lane.b32.xlu0 %v1218, 126
        %v1444 = vpop.permute.xlu0 %1443
        %1445 = vrot.lane.b32.xlu0 %v1219, 126
        %v1446 = vpop.permute.xlu0 %1445
        %1447 = vrot.lane.b32.xlu0 %v1220, 126
        %v1448 = vpop.permute.xlu0 %1447
        %1449 = vrot.lane.b32.xlu0 %v1221, 126
        %v1450 = vpop.permute.xlu0 %1449
        %1451 = vrot.lane.b32.xlu0 %v1222, 126
        %v1452 = vpop.permute.xlu0 %1451
        %1453 = vrot.lane.b32.xlu0 %v1223, 126
        %v1454 = vpop.permute.xlu0 %1453
        %1455 = vrot.lane.b32.xlu0 %v1224, 126
        %v1456 = vpop.permute.xlu0 %1455
        %1457 = vrot.lane.b32.xlu0 %v1225, 126
        %v1458 = vpop.permute.xlu0 %1457
        %1459 = vrot.lane.b32.xlu0 %v1226, 126
        %v1460 = vpop.permute.xlu0 %1459
        %1461 = vrot.lane.b32.xlu0 %v1227, 126
        %v1462 = vpop.permute.xlu0 %1461
        %1463 = vrot.lane.b32.xlu0 %v1228, 126
        %v1464 = vpop.permute.xlu0 %1463
        %1465 = vrot.lane.b32.xlu0 %v1229, 126
        %v1466 = vpop.permute.xlu0 %1465
        %1467 = vrot.lane.b32.xlu0 %v1230, 126
        %v1468 = vpop.permute.xlu0 %1467
        %1469 = vrot.lane.b32.xlu0 %v1231, 126
        %v1470 = vpop.permute.xlu0 %1469
        %1471 = vrot.lane.b32.xlu0 %v1232, 126
        %v1472 = vpop.permute.xlu0 %1471
        %1473 = vrot.lane.b32.xlu0 %v1233, 126
        %v1474 = vpop.permute.xlu0 %1473
        %1475 = vrot.lane.b32.xlu0 %v1234, 126
        %v1476 = vpop.permute.xlu0 %1475
        %1477 = vrot.lane.b32.xlu0 %v1235, 126
        %v1478 = vpop.permute.xlu0 %1477
        %1479 = vrot.lane.b32.xlu0 %v1236, 126
        %v1480 = vpop.permute.xlu0 %1479
        %1481 = vrot.lane.b32.xlu0 %v1237, 126
        %v1482 = vpop.permute.xlu0 %1481
        %1483 = vrot.lane.b32.xlu0 %v1238, 126
        %v1484 = vpop.permute.xlu0 %1483
        %1485 = vrot.lane.b32.xlu0 %v1239, 126
        %v1486 = vpop.permute.xlu0 %1485
        %1487 = vrot.lane.b32.xlu0 %v1240, 126
        %v1488 = vpop.permute.xlu0 %1487
        %v1489 = vsel %vm404, %v1426, %v1428
        %v1490 = vsel %vm404, %v1428, %v1430
        %v1491 = vsel %vm404, %v1430, %v1432
        %v1492 = vsel %vm404, %v1434, %v1436
        %v1493 = vsel %vm404, %v1436, %v1438
        %v1494 = vsel %vm404, %v1438, %v1440
        %v1495 = vsel %vm404, %v1442, %v1444
        %v1496 = vsel %vm404, %v1444, %v1446
        %v1497 = vsel %vm404, %v1446, %v1448
        %v1498 = vsel %vm404, %v1450, %v1452
        %v1499 = vsel %vm404, %v1452, %v1454
        %v1500 = vsel %vm404, %v1454, %v1456
        %v1501 = vsel %vm404, %v1458, %v1460
        %v1502 = vsel %vm404, %v1460, %v1462
        %v1503 = vsel %vm404, %v1462, %v1464
        %v1504 = vsel %vm404, %v1466, %v1468
        %v1505 = vsel %vm404, %v1468, %v1470
        %v1506 = vsel %vm404, %v1470, %v1472
        %v1507 = vsel %vm404, %v1474, %v1476
        %v1508 = vsel %vm404, %v1476, %v1478
        %v1509 = vsel %vm404, %v1478, %v1480
        %v1510 = vsel %vm404, %v1482, %v1484
        %v1511 = vsel %vm404, %v1484, %v1486
        %v1512 = vsel %vm404, %v1486, %v1488
        %v1545 = vadd.f32 %v1393, %v1489
        %v1546 = vadd.f32 %v1394, %v1490
        %v1547 = vadd.f32 %v1395, %v1491
        %v1548 = vadd.f32 %v1396, %v1432
        %v1549 = vadd.f32 %v1397, %v1492
        %v1550 = vadd.f32 %v1398, %v1493
        %v1551 = vadd.f32 %v1399, %v1494
        %v1552 = vadd.f32 %v1400, %v1440
        %v1553 = vadd.f32 %v1401, %v1495
        %v1554 = vadd.f32 %v1402, %v1496
        %v1555 = vadd.f32 %v1403, %v1497
        %v1556 = vadd.f32 %v1404, %v1448
        %v1557 = vadd.f32 %v1405, %v1498
        %v1558 = vadd.f32 %v1406, %v1499
        %v1559 = vadd.f32 %v1407, %v1500
        %v1560 = vadd.f32 %v1408, %v1456
        %v1561 = vadd.f32 %v1409, %v1501
        %v1562 = vadd.f32 %v1410, %v1502
        %v1563 = vadd.f32 %v1411, %v1503
        %v1564 = vadd.f32 %v1412, %v1464
        %v1565 = vadd.f32 %v1413, %v1504
        %v1566 = vadd.f32 %v1414, %v1505
        %v1567 = vadd.f32 %v1415, %v1506
        %v1568 = vadd.f32 %v1416, %v1472
        %v1569 = vadd.f32 %v1417, %v1507
        %v1570 = vadd.f32 %v1418, %v1508
        %v1571 = vadd.f32 %v1419, %v1509
        %v1572 = vadd.f32 %v1420, %v1480
        %v1573 = vadd.f32 %v1421, %v1510
        %v1574 = vadd.f32 %v1422, %v1511
        %v1575 = vadd.f32 %v1423, %v1512
        %v1576 = vadd.f32 %v1424, %v1488
        %1577 = vrot.lane.b32.xlu0 %v1209, 125
        %v1578 = vpop.permute.xlu0 %1577
        %1579 = vrot.lane.b32.xlu0 %v1210, 125
        %v1580 = vpop.permute.xlu0 %1579
        %1581 = vrot.lane.b32.xlu0 %v1211, 125
        %v1582 = vpop.permute.xlu0 %1581
        %1583 = vrot.lane.b32.xlu0 %v1212, 125
        %v1584 = vpop.permute.xlu0 %1583
        %1585 = vrot.lane.b32.xlu0 %v1213, 125
        %v1586 = vpop.permute.xlu0 %1585
        %1587 = vrot.lane.b32.xlu0 %v1214, 125
        %v1588 = vpop.permute.xlu0 %1587
        %1589 = vrot.lane.b32.xlu0 %v1215, 125
        %v1590 = vpop.permute.xlu0 %1589
        %1591 = vrot.lane.b32.xlu0 %v1216, 125
        %v1592 = vpop.permute.xlu0 %1591
        %1593 = vrot.lane.b32.xlu0 %v1217, 125
        %v1594 = vpop.permute.xlu0 %1593
        %1595 = vrot.lane.b32.xlu0 %v1218, 125
        %v1596 = vpop.permute.xlu0 %1595
        %1597 = vrot.lane.b32.xlu0 %v1219, 125
        %v1598 = vpop.permute.xlu0 %1597
        %1599 = vrot.lane.b32.xlu0 %v1220, 125
        %v1600 = vpop.permute.xlu0 %1599
        %1601 = vrot.lane.b32.xlu0 %v1221, 125
        %v1602 = vpop.permute.xlu0 %1601
        %1603 = vrot.lane.b32.xlu0 %v1222, 125
        %v1604 = vpop.permute.xlu0 %1603
        %1605 = vrot.lane.b32.xlu0 %v1223, 125
        %v1606 = vpop.permute.xlu0 %1605
        %1607 = vrot.lane.b32.xlu0 %v1224, 125
        %v1608 = vpop.permute.xlu0 %1607
        %1609 = vrot.lane.b32.xlu0 %v1225, 125
        %v1610 = vpop.permute.xlu0 %1609
        %1611 = vrot.lane.b32.xlu0 %v1226, 125
        %v1612 = vpop.permute.xlu0 %1611
        %1613 = vrot.lane.b32.xlu0 %v1227, 125
        %v1614 = vpop.permute.xlu0 %1613
        %1615 = vrot.lane.b32.xlu0 %v1228, 125
        %v1616 = vpop.permute.xlu0 %1615
        %1617 = vrot.lane.b32.xlu0 %v1229, 125
        %v1618 = vpop.permute.xlu0 %1617
        %1619 = vrot.lane.b32.xlu0 %v1230, 125
        %v1620 = vpop.permute.xlu0 %1619
        %1621 = vrot.lane.b32.xlu0 %v1231, 125
        %v1622 = vpop.permute.xlu0 %1621
        %1623 = vrot.lane.b32.xlu0 %v1232, 125
        %v1624 = vpop.permute.xlu0 %1623
        %1625 = vrot.lane.b32.xlu0 %v1233, 125
        %v1626 = vpop.permute.xlu0 %1625
        %1627 = vrot.lane.b32.xlu0 %v1234, 125
        %v1628 = vpop.permute.xlu0 %1627
        %1629 = vrot.lane.b32.xlu0 %v1235, 125
        %v1630 = vpop.permute.xlu0 %1629
        %1631 = vrot.lane.b32.xlu0 %v1236, 125
        %v1632 = vpop.permute.xlu0 %1631
        %1633 = vrot.lane.b32.xlu0 %v1237, 125
        %v1634 = vpop.permute.xlu0 %1633
        %1635 = vrot.lane.b32.xlu0 %v1238, 125
        %v1636 = vpop.permute.xlu0 %1635
        %1637 = vrot.lane.b32.xlu0 %v1239, 125
        %v1638 = vpop.permute.xlu0 %1637
        %1639 = vrot.lane.b32.xlu0 %v1240, 125
        %v1640 = vpop.permute.xlu0 %1639
        %v1641 = vsel %vm557, %v1578, %v1580
        %v1642 = vsel %vm557, %v1580, %v1582
        %v1643 = vsel %vm557, %v1582, %v1584
        %v1644 = vsel %vm557, %v1586, %v1588
        %v1645 = vsel %vm557, %v1588, %v1590
        %v1646 = vsel %vm557, %v1590, %v1592
        %v1647 = vsel %vm557, %v1594, %v1596
        %v1648 = vsel %vm557, %v1596, %v1598
        %v1649 = vsel %vm557, %v1598, %v1600
        %v1650 = vsel %vm557, %v1602, %v1604
        %v1651 = vsel %vm557, %v1604, %v1606
        %v1652 = vsel %vm557, %v1606, %v1608
        %v1653 = vsel %vm557, %v1610, %v1612
        %v1654 = vsel %vm557, %v1612, %v1614
        %v1655 = vsel %vm557, %v1614, %v1616
        %v1656 = vsel %vm557, %v1618, %v1620
        %v1657 = vsel %vm557, %v1620, %v1622
        %v1658 = vsel %vm557, %v1622, %v1624
        %v1659 = vsel %vm557, %v1626, %v1628
        %v1660 = vsel %vm557, %v1628, %v1630
        %v1661 = vsel %vm557, %v1630, %v1632
        %v1662 = vsel %vm557, %v1634, %v1636
        %v1663 = vsel %vm557, %v1636, %v1638
        %v1664 = vsel %vm557, %v1638, %v1640
        %v1697 = vadd.f32 %v1545, %v1641
        %v1698 = vadd.f32 %v1546, %v1642
        %v1699 = vadd.f32 %v1547, %v1643
        %v1700 = vadd.f32 %v1548, %v1584
        %v1701 = vadd.f32 %v1549, %v1644
        %v1702 = vadd.f32 %v1550, %v1645
        %v1703 = vadd.f32 %v1551, %v1646
        %v1704 = vadd.f32 %v1552, %v1592
        %v1705 = vadd.f32 %v1553, %v1647
        %v1706 = vadd.f32 %v1554, %v1648
        %v1707 = vadd.f32 %v1555, %v1649
        %v1708 = vadd.f32 %v1556, %v1600
        %v1709 = vadd.f32 %v1557, %v1650
        %v1710 = vadd.f32 %v1558, %v1651
        %v1711 = vadd.f32 %v1559, %v1652
        %v1712 = vadd.f32 %v1560, %v1608
        %v1713 = vadd.f32 %v1561, %v1653
        %v1714 = vadd.f32 %v1562, %v1654
        %v1715 = vadd.f32 %v1563, %v1655
        %v1716 = vadd.f32 %v1564, %v1616
        %v1717 = vadd.f32 %v1565, %v1656
        %v1718 = vadd.f32 %v1566, %v1657
        %v1719 = vadd.f32 %v1567, %v1658
        %v1720 = vadd.f32 %v1568, %v1624
        %v1721 = vadd.f32 %v1569, %v1659
        %v1722 = vadd.f32 %v1570, %v1660
        %v1723 = vadd.f32 %v1571, %v1661
        %v1724 = vadd.f32 %v1572, %v1632
        %v1725 = vadd.f32 %v1573, %v1662
        %v1726 = vadd.f32 %v1574, %v1663
        %v1727 = vadd.f32 %v1575, %v1664
        %v1728 = vadd.f32 %v1576, %v1640
        %vm1729 = vcmp.gt.f32.partialorder %v1697, 0.0
        %vm1730 = vcmp.gt.f32.partialorder %v1698, 0.0
        %vm1731 = vcmp.gt.f32.partialorder %v1699, 0.0
        %vm1732 = vcmp.gt.f32.partialorder %v1700, 0.0
        %vm1733 = vcmp.gt.f32.partialorder %v1701, 0.0
        %vm1734 = vcmp.gt.f32.partialorder %v1702, 0.0
        %vm1735 = vcmp.gt.f32.partialorder %v1703, 0.0
        %vm1736 = vcmp.gt.f32.partialorder %v1704, 0.0
        %vm1737 = vcmp.gt.f32.partialorder %v1705, 0.0
        %vm1738 = vcmp.gt.f32.partialorder %v1706, 0.0
        %vm1739 = vcmp.gt.f32.partialorder %v1707, 0.0
        %vm1740 = vcmp.gt.f32.partialorder %v1708, 0.0
        %vm1741 = vcmp.gt.f32.partialorder %v1709, 0.0
        %vm1742 = vcmp.gt.f32.partialorder %v1710, 0.0
        %vm1743 = vcmp.gt.f32.partialorder %v1711, 0.0
        %vm1744 = vcmp.gt.f32.partialorder %v1712, 0.0
        %vm1745 = vcmp.gt.f32.partialorder %v1713, 0.0
        %vm1746 = vcmp.gt.f32.partialorder %v1714, 0.0
        %vm1747 = vcmp.gt.f32.partialorder %v1715, 0.0
        %vm1748 = vcmp.gt.f32.partialorder %v1716, 0.0
        %vm1749 = vcmp.gt.f32.partialorder %v1717, 0.0
        %vm1750 = vcmp.gt.f32.partialorder %v1718, 0.0
        %vm1751 = vcmp.gt.f32.partialorder %v1719, 0.0
        %vm1752 = vcmp.gt.f32.partialorder %v1720, 0.0
        %vm1753 = vcmp.gt.f32.partialorder %v1721, 0.0
        %vm1754 = vcmp.gt.f32.partialorder %v1722, 0.0
        %vm1755 = vcmp.gt.f32.partialorder %v1723, 0.0
        %vm1756 = vcmp.gt.f32.partialorder %v1724, 0.0
        %vm1757 = vcmp.gt.f32.partialorder %v1725, 0.0
        %vm1758 = vcmp.gt.f32.partialorder %v1726, 0.0
        %vm1759 = vcmp.gt.f32.partialorder %v1727, 0.0
        %vm1760 = vcmp.gt.f32.partialorder %v1728, 0.0
        %v1761 = vsel %vm1729, 1, 0
        %v1762 = vsel %vm1730, 1, 0
        %v1763 = vsel %vm1731, 1, 0
        %v1764 = vsel %vm1732, 1, 0
        %v1765 = vsel %vm1733, 1, 0
        %v1766 = vsel %vm1734, 1, 0
        %v1767 = vsel %vm1735, 1, 0
        %v1768 = vsel %vm1736, 1, 0
        %v1769 = vsel %vm1737, 1, 0
        %v1770 = vsel %vm1738, 1, 0
        %v1771 = vsel %vm1739, 1, 0
        %v1772 = vsel %vm1740, 1, 0
        %v1773 = vsel %vm1741, 1, 0
        %v1774 = vsel %vm1742, 1, 0
        %v1775 = vsel %vm1743, 1, 0
        %v1776 = vsel %vm1744, 1, 0
        %v1777 = vsel %vm1745, 1, 0
        %v1778 = vsel %vm1746, 1, 0
        %v1779 = vsel %vm1747, 1, 0
        %v1780 = vsel %vm1748, 1, 0
        %v1781 = vsel %vm1749, 1, 0
        %v1782 = vsel %vm1750, 1, 0
        %v1783 = vsel %vm1751, 1, 0
        %v1784 = vsel %vm1752, 1, 0
        %v1785 = vsel %vm1753, 1, 0
        %v1786 = vsel %vm1754, 1, 0
        %v1787 = vsel %vm1755, 1, 0
        %v1788 = vsel %vm1756, 1, 0
        %v1789 = vsel %vm1757, 1, 0
        %v1790 = vsel %vm1758, 1, 0
        %v1791 = vsel %vm1759, 1, 0
        %v1792 = vsel %vm1760, 1, 0
        %v1793 = vcvt.s32.f32 %v1761
        %v1794 = vcvt.s32.f32 %v1762
        %v1795 = vcvt.s32.f32 %v1763
        %v1796 = vcvt.s32.f32 %v1764
        %v1797 = vcvt.s32.f32 %v1765
        %v1798 = vcvt.s32.f32 %v1766
        %v1799 = vcvt.s32.f32 %v1767
        %v1800 = vcvt.s32.f32 %v1768
        %v1801 = vcvt.s32.f32 %v1769
        %v1802 = vcvt.s32.f32 %v1770
        %v1803 = vcvt.s32.f32 %v1771
        %v1804 = vcvt.s32.f32 %v1772
        %v1805 = vcvt.s32.f32 %v1773
        %v1806 = vcvt.s32.f32 %v1774
        %v1807 = vcvt.s32.f32 %v1775
        %v1808 = vcvt.s32.f32 %v1776
        %v1809 = vcvt.s32.f32 %v1777
        %v1810 = vcvt.s32.f32 %v1778
        %v1811 = vcvt.s32.f32 %v1779
        %v1812 = vcvt.s32.f32 %v1780
        %v1813 = vcvt.s32.f32 %v1781
        %v1814 = vcvt.s32.f32 %v1782
        %v1815 = vcvt.s32.f32 %v1783
        %v1816 = vcvt.s32.f32 %v1784
        %v1817 = vcvt.s32.f32 %v1785
        %v1818 = vcvt.s32.f32 %v1786
        %v1819 = vcvt.s32.f32 %v1787
        %v1820 = vcvt.s32.f32 %v1788
        %v1821 = vcvt.s32.f32 %v1789
        %v1822 = vcvt.s32.f32 %v1790
        %v1823 = vcvt.s32.f32 %v1791
        %v1824 = vcvt.s32.f32 %v1792
        %v1825 = vpack.c.bf16 %v1797, %v1793
        %v1826 = vpack.c.bf16 %v1798, %v1794
        %v1827 = vpack.c.bf16 %v1799, %v1795
        %v1828 = vpack.c.bf16 %v1800, %v1796
        %v1829 = vpack.c.bf16 %v1805, %v1801
        %v1830 = vpack.c.bf16 %v1806, %v1802
        %v1831 = vpack.c.bf16 %v1807, %v1803
        %v1832 = vpack.c.bf16 %v1808, %v1804
        %v1833 = vpack.c.bf16 %v1813, %v1809
        %v1834 = vpack.c.bf16 %v1814, %v1810
        %v1835 = vpack.c.bf16 %v1815, %v1811
        %v1836 = vpack.c.bf16 %v1816, %v1812
        %v1837 = vpack.c.bf16 %v1821, %v1817
        %v1838 = vpack.c.bf16 %v1822, %v1818
        %v1839 = vpack.c.bf16 %v1823, %v1819
        %v1840 = vpack.c.bf16 %v1824, %v1820
        %v1842 = vsel %vm557, %v1828, 0
        %v1845 = vsel %vm557, %v1832, 0
        %v1848 = vsel %vm557, %v1836, 0
        %v1851 = vsel %vm557, %v1840, 0
        %1853 = vmatpush.bf16.msra.mxu0 %v1025
        %1854 = vmatpush.bf16.msra.mxu0 %v1024
        %1855 = vmatpush.bf16.msra.mxu0 %v1023
        %1856 = vmatpush.bf16.msra.mxu0 %v1022
        %1857 = vmatpush.bf16.msra.mxu0 %v1021
        %1858 = vmatpush.bf16.msra.mxu0 %v1020
        %1859 = vmatpush.bf16.msra.mxu0 %v1019
        %1860 = vmatpush.bf16.msra.mxu0 %v1018
        %1861 = vmatmul.bf16.gmra.mxu0 %v1825
        %v1862 = vpop.f32.mrf.mxu0
        %v1863 = vadd.f32 0.0, %v1862
        %v1864 = vpop.f32.mrf.mxu0
        %v1865 = vadd.f32 0.0, %v1864
        %1866 = vmatmul.bf16.gmra.mxu0 %v1829
        %v1867 = vpop.f32.mrf.mxu0
        %v1868 = vadd.f32 0.0, %v1867
        %v1869 = vpop.f32.mrf.mxu0
        %v1870 = vadd.f32 0.0, %v1869
        %1871 = vmatmul.bf16.gmra.mxu0 %v1833
        %v1872 = vpop.f32.mrf.mxu0
        %v1873 = vadd.f32 0.0, %v1872
        %v1874 = vpop.f32.mrf.mxu0
        %v1875 = vadd.f32 0.0, %v1874
        %1876 = vmatmul.bf16.gmra.mxu0 %v1837
        %v1877 = vpop.f32.mrf.mxu0
        %v1878 = vadd.f32 0.0, %v1877
        %v1879 = vpop.f32.mrf.mxu0
        %v1880 = vadd.f32 0.0, %v1879
        %1881 = vdwg.mxu0
        %1882 = vmatpush.bf16.msra.mxu0 %v1033
        %1883 = vmatpush.bf16.msra.mxu0 %v1032
        %1884 = vmatpush.bf16.msra.mxu0 %v1031
        %1885 = vmatpush.bf16.msra.mxu0 %v1030
        %1886 = vmatpush.bf16.msra.mxu0 %v1029
        %1887 = vmatpush.bf16.msra.mxu0 %v1028
        %1888 = vmatpush.bf16.msra.mxu0 %v1027
        %1889 = vmatpush.bf16.msra.mxu0 %v1026
        %1890 = vmatmul.bf16.gmra.mxu0 %v1826
        %v1891 = vpop.f32.mrf.mxu0
        %v1892 = vadd.f32 %v1863, %v1891
        %v1893 = vpop.f32.mrf.mxu0
        %v1894 = vadd.f32 %v1865, %v1893
        %1895 = vmatmul.bf16.gmra.mxu0 %v1830
        %v1896 = vpop.f32.mrf.mxu0
        %v1897 = vadd.f32 %v1868, %v1896
        %v1898 = vpop.f32.mrf.mxu0
        %v1899 = vadd.f32 %v1870, %v1898
        %1900 = vmatmul.bf16.gmra.mxu0 %v1834
        %v1901 = vpop.f32.mrf.mxu0
        %v1902 = vadd.f32 %v1873, %v1901
        %v1903 = vpop.f32.mrf.mxu0
        %v1904 = vadd.f32 %v1875, %v1903
        %1905 = vmatmul.bf16.gmra.mxu0 %v1838
        %v1906 = vpop.f32.mrf.mxu0
        %v1907 = vadd.f32 %v1878, %v1906
        %v1908 = vpop.f32.mrf.mxu0
        %v1909 = vadd.f32 %v1880, %v1908
        %1910 = vdwg.mxu0
        %1911 = vmatpush.bf16.msra.mxu0 %v1041
        %1912 = vmatpush.bf16.msra.mxu0 %v1040
        %1913 = vmatpush.bf16.msra.mxu0 %v1039
        %1914 = vmatpush.bf16.msra.mxu0 %v1038
        %1915 = vmatpush.bf16.msra.mxu0 %v1037
        %1916 = vmatpush.bf16.msra.mxu0 %v1036
        %1917 = vmatpush.bf16.msra.mxu0 %v1035
        %1918 = vmatpush.bf16.msra.mxu0 %v1034
        %1919 = vmatmul.bf16.gmra.mxu0 %v1827
        %v1920 = vpop.f32.mrf.mxu0
        %v1921 = vadd.f32 %v1892, %v1920
        %v1922 = vpop.f32.mrf.mxu0
        %v1923 = vadd.f32 %v1894, %v1922
        %1924 = vmatmul.bf16.gmra.mxu0 %v1831
        %v1925 = vpop.f32.mrf.mxu0
        %v1926 = vadd.f32 %v1897, %v1925
        %v1927 = vpop.f32.mrf.mxu0
        %v1928 = vadd.f32 %v1899, %v1927
        %1929 = vmatmul.bf16.gmra.mxu0 %v1835
        %v1930 = vpop.f32.mrf.mxu0
        %v1931 = vadd.f32 %v1902, %v1930
        %v1932 = vpop.f32.mrf.mxu0
        %v1933 = vadd.f32 %v1904, %v1932
        %1934 = vmatmul.bf16.gmra.mxu0 %v1839
        %v1935 = vpop.f32.mrf.mxu0
        %v1936 = vadd.f32 %v1907, %v1935
        %v1937 = vpop.f32.mrf.mxu0
        %v1938 = vadd.f32 %v1909, %v1937
        %1939 = vdwg.mxu0
        %1940 = vmatpush.bf16.msra.mxu0 %v1067
        %1941 = vmatpush.bf16.msra.mxu0 %v1048
        %1942 = vmatpush.bf16.msra.mxu0 %v1047
        %1943 = vmatpush.bf16.msra.mxu0 %v1046
        %1944 = vmatpush.bf16.msra.mxu0 %v1045
        %1945 = vmatpush.bf16.msra.mxu0 %v1044
        %1946 = vmatpush.bf16.msra.mxu0 %v1043
        %1947 = vmatpush.bf16.msra.mxu0 %v1042
        %1948 = vmatmul.bf16.gmra.mxu0 %v1842
        %v1949 = vpop.f32.mrf.mxu0
        %v1950 = vadd.f32 %v1921, %v1949
        %v1951 = vpop.f32.mrf.mxu0
        %v1952 = vadd.f32 %v1923, %v1951
        %1953 = vmatmul.bf16.gmra.mxu0 %v1845
        %v1954 = vpop.f32.mrf.mxu0
        %v1955 = vadd.f32 %v1926, %v1954
        %v1956 = vpop.f32.mrf.mxu0
        %v1957 = vadd.f32 %v1928, %v1956
        %1958 = vmatmul.bf16.gmra.mxu0 %v1848
        %v1959 = vpop.f32.mrf.mxu0
        %v1960 = vadd.f32 %v1931, %v1959
        %v1961 = vpop.f32.mrf.mxu0
        %v1962 = vadd.f32 %v1933, %v1961
        %1963 = vmatmul.bf16.gmra.mxu0 %v1851
        %v1964 = vpop.f32.mrf.mxu0
        %v1965 = vadd.f32 %v1936, %v1964
        %v1966 = vpop.f32.mrf.mxu0
        %v1967 = vadd.f32 %v1938, %v1966
        %1968 = vdwg.mxu0
        %vm1969 = vcmp.gt.f32.partialorder %v1950, 0.0
        %vm1970 = vcmp.gt.f32.partialorder %v1952, 0.0
        %vm1971 = vcmp.gt.f32.partialorder %v1955, 0.0
        %vm1972 = vcmp.gt.f32.partialorder %v1957, 0.0
        %vm1973 = vcmp.gt.f32.partialorder %v1960, 0.0
        %vm1974 = vcmp.gt.f32.partialorder %v1962, 0.0
        %vm1975 = vcmp.gt.f32.partialorder %v1965, 0.0
        %vm1976 = vcmp.gt.f32.partialorder %v1967, 0.0
        %vm1977 = vmpackc.low %vm1970, %vm1969
        %vm1978 = vmpackc.low %vm1972, %vm1971
        %v1979 = vsel %vm1977, 16711935, 0
        %v1980 = vsel %vm1978, 16711935, 0
        %v1981 = vpack.c.b8 %v1980, %v1979
        %vm1982 = vnez %v1981
        %vm1983 = vmpackc.low %vm1974, %vm1973
        %vm1984 = vmpackc.low %vm1976, %vm1975
        %v1985 = vsel %vm1983, 16711935, 0
        %v1986 = vsel %vm1984, 16711935, 0
        %v1987 = vpack.c.b8 %v1986, %v1985
        %vm1988 = vnez %v1987
        %v1989 = vsel %vm1982, 16843009, 0
        %v1990 = vsel %vm1988, 16843009, 0
        %1991 = vst [vmem:[%s112 + $0x8] sm:$0xff] %v1989
        %1992 = vst [vmem:[%s112 + $0x18] sm:$0xff] %v1990
        %s1993 = sand.u32 %s49, 1
        %s1994 = scalar_lea.sflag [#allocation3], %s1993
        %s1995 = sand.u32 %s49, 1
        %s1996 = smul.addr %s1995, 32
        %s1997 = scalar_lea.vmem [#allocation2], %s1996
        // Predicated region
        $region25: #{relational_mask_pallas.1} parent=23 // pred_check
          %p1998 = pneg %p59
        $region26: #{relational_mask_pallas.1} parent=23 // pred_check_branch
          %2000 = sbr.rel (%p1998) target = $region28
        $region27: #{relational_mask_pallas.1} parent=23 // pred_region
          %s2001 = smul.u32 2, %s15
          %2003 = vsyncadd %s1994, 0
          %s2004 = smul.addr %s2001, 2
          %s2005 = smul.addr %s2004, 8
          %s2006 = scalar_lea.hbm %s1, %s2005
          %s2007 = sshll.u32 %s1997, 4
          %s2008 = int_to_ptr.vmem [resolvable:$true] %s2007
          %s2009 = sshll.u32 %s2006, 4
          %s2010 = int_to_ptr.hbm [resolvable:$true] %s2009
          %2015 = dma.vmem_to_hbm [thread:$0]  %s2008, 512, %s2010, %s1994, 256, 256, 16
        $region28: #{relational_mask_pallas.1} parent=23 // pred_fallthru
          _
      $region24: #{relational_mask_pallas.1} parent=5 // pred_fallthru
        _
      %p2016 = scmp.le.s32.totalorder 2, %s10
      // Predicated region
      $region29: #{relational_mask_pallas.1} parent=5 // pred_check
        %p2017 = pneg %p2016
      $region30: #{relational_mask_pallas.1} parent=5 // pred_check_branch
        %2019 = sbr.rel (%p2017) target = $region32
      $region31: #{relational_mask_pallas.1} parent=5 // pred_region
        %s2020 = ssub.s32 %s10, 2
        // Predicated region
        $region33: #{relational_mask_pallas.1} parent=31 // pred_check
          %p2021 = pneg %p65
        $region34: #{relational_mask_pallas.1} parent=31 // pred_check_branch
          %2023 = sbr.rel (%p2021) target = $region36
        $region35: #{relational_mask_pallas.1} parent=31 // pred_region
          %s2024 = sand.u32 %s50, 1
          %s2025 = scalar_lea.sflag [#allocation3], %s2024
          %s2026 = sand.u32 %s50, 1
          %s2027 = smul.addr %s2026, 32
          %s2028 = scalar_lea.vmem [#allocation2], %s2027
          %2030 = dma.done %s2025, 512
        $region36: #{relational_mask_pallas.1} parent=31 // pred_fallthru
          _
      $region32: #{relational_mask_pallas.1} parent=5 // pred_fallthru
        _
    $region6: #{relational_mask_pallas.1} parent=1 // loop_footer
      %s14 = sadd.s32 1, %s10
    $region7: #{relational_mask_pallas.1} parent=1 // loop_footer_branch
      %9 = sbr.rel target = $region3
    $region8: #{relational_mask_pallas.1} parent=1 // loop_exit
      _
    %2031 = vsyncpa [#allocation3], 1
    %s2032 = scalar_lea.sflag [#allocation3], 1
    %2033 = vsyncpa %s2032, 1

</llo_original>
